<compile_context>
chip_gen: v6e
topology: v6e:2x2x1
jax: 0.10.0
libtpu: 0.0.40
codegen_flags: <defaults>
</compile_context>

<pallas_src>
import numpy as np
import jax
import jax.numpy as jnp
from jax.experimental import pallas as pl
from jax.experimental.pallas import tpu as pltpu


# ----------------------------- config ---------------------------------------
WIN_LENGTH = 304
HOP_LENGTH = 152
N_FFT = 304
N_FREQ = N_FFT // 2 + 1            # 153 onesided bins
N_FREQ_PAD = 160                   # sublane-padded bin count (multiple of 8)
MAX_TILE_F = 1024                  # frames per grid step (multiple of 128)


def _round_up(x, m):
    return ((x + m - 1) // m) * m


def _cdiv(a, b):
    return (a + b - 1) // b


# ----------------------------- precomputed bases ------------------------------
def _build_bases():
    """Windowed rDFT bases, transposed and fused along sublanes.

    Returns (bt_top, bt_bot), each [2*N_FREQ_PAD, HOP]:
      rows [0, 153)    :  window * cos(2*pi*k*n/N)   (-> real part)
      rows [160, 313)  : -window * sin(2*pi*k*n/N)   (-> imag part)
    bt_top covers frame samples n in [0, 152), bt_bot covers n in [152, 304).
    """
    n = np.arange(WIN_LENGTH, dtype=np.float64)
    window = 0.5 - 0.5 * np.cos(2.0 * np.pi * n / WIN_LENGTH)    # periodic Hann
    window_full = np.zeros(N_FFT, dtype=np.float64)
    off = (N_FFT - WIN_LENGTH) // 2
    window_full[off:off + WIN_LENGTH] = window

    t = np.arange(N_FFT, dtype=np.float64)
    k = np.arange(N_FREQ, dtype=np.float64)
    ang = 2.0 * np.pi * np.outer(k, t) / N_FFT                   # [n_freq, n_fft]
    cos_b = np.cos(ang) * window_full[None, :]
    sin_b = -np.sin(ang) * window_full[None, :]

    fused = np.zeros((2 * N_FREQ_PAD, N_FFT), dtype=np.float32)
    fused[:N_FREQ, :] = cos_b
    fused[N_FREQ_PAD:N_FREQ_PAD + N_FREQ, :] = sin_b
    bt_top = np.ascontiguousarray(fused[:, :HOP_LENGTH])         # [320, 152]
    bt_bot = np.ascontiguousarray(fused[:, HOP_LENGTH:])         # [320, 152]
    return jnp.asarray(bt_top), jnp.asarray(bt_bot)


_BT_TOP, _BT_BOT = _build_bases()                                # built once


# ----------------------------- Pallas kernel ---------------------------------
_NT_DIMS = (((1,), (1,)), ((), ()))     # A @ B^T : contract dim 1 of both operands


def _spectrogram_kernel(main_ref, next_ref, bt_top_ref, bt_bot_ref,
                        mag_ref, phase_ref):
    """One (batch row, frame tile).

      main_ref  : [tile_f, HOP]  blocks i*tile_f .. i*tile_f+tile_f-1 (first halves)
      next_ref  : [8, HOP]       blocks (i+1)*tile_f .. +7 (row 0 = carry block)
      bt_*_ref  : [320, HOP]     transposed windowed cos / -sin bases (resident)
      mag/phase : [N_FREQ, tile_f] freq-major outputs
    """
    tile_f = main_ref.shape[0]
    main = main_ref[...]
    # Second halves of the frames = blocks shifted up by one row; the last row
    # comes from the first block of the next tile.
    win = jnp.concatenate([main, next_ref[...]], axis=0)          # [tile_f+8, HOP]
    second = win[1:tile_f + 1, :]                                 # [tile_f, HOP]

    # basis^T @ frames^T -> [2*N_FREQ_PAD, tile_f] (freq on sublanes, frames on lanes)
    # NOTE: f32 operands with f32 accumulation.  Set precision=HIGHEST if
    # bit-level parity with torch.stft is required; switch to bf16 operands for
    # extra MXU speed (only near-zero-magnitude bins' phase degrades).
    acc = jax.lax.dot_general(bt_top_ref[...], main, _NT_DIMS,
                              preferred_element_type=jnp.float32)
    acc = acc + jax.lax.dot_general(bt_bot_ref[...], second, _NT_DIMS,
                                    preferred_element_type=jnp.float32)

    real = acc[:N_FREQ, :]                                        # [153, tile_f]
    imag = acc[N_FREQ_PAD:N_FREQ_PAD + N_FREQ, :]                 # [153, tile_f]
    # TODO(synk): if profiling shows the EUP-bound sqrt/atan2 epilogue dominating
    # (likely on v5e or with a bf16 matmul), hand-roll atan2 with
    # pl.reciprocal(approx=True) + a VPU polynomial and use rsqrt for magnitude.
    mag_ref[...] = jnp.sqrt(real * real + imag * imag)
    phase_ref[...] = jnp.arctan2(imag, real)                      # atan2(0,0) = 0


# ----------------------------- forward (jitted glue) -------------------------
@jax.jit
def spectrogram_forward(audio):
    """audio: [B, T] -> (magnitude, phase), each [B, n_fft//2 + 1, T//hop + 1]."""
    B, T = audio.shape
    pad = N_FFT // 2
    if T <= pad:                     # same constraint as torch reflect padding
        raise ValueError(f"reflect padding requires T > {pad}, got T={T}")
    n_frames = T // HOP_LENGTH + 1

    # Frame tile: multiple of 128 (lane-dense output stores), capped at 1024
    # (safe for v5e's 16 MiB default scoped VMEM), and >= 2 tiles when possible
    # so the "parallel" grid axes keep both v7x TensorCores busy.
    num_splits = max(2, _cdiv(n_frames, MAX_TILE_F))
    tile_f = max(128, min(MAX_TILE_F, _round_up(_cdiv(n_frames, num_splits), 128)))
    num_tiles = _cdiv(n_frames, tile_f)
    blocks_per_tile = tile_f // 8

    # hop == n_fft//2: frame i = [block i, block i+1] of 152-sample chunks.
    # Zero-pad the tail so every (main, next) tile DMA stays strictly in bounds;
    # reflect pad + zero pad + reshape fuse into one HBM write of `blocks`.
    n_blocks = num_tiles * tile_f + 8
    audio_p = jnp.pad(audio.astype(jnp.float32), ((0, 0), (pad, pad)), mode="reflect")
    audio_p = jnp.pad(audio_p, ((0, 0), (0, n_blocks * HOP_LENGTH - (T + 2 * pad))))
    blocks = audio_p.reshape(B, n_blocks, HOP_LENGTH)

    mag, phase = pl.pallas_call(
        _spectrogram_kernel,
        out_shape=(
            jax.ShapeDtypeStruct((B, N_FREQ, n_frames), jnp.float32),
            jax.ShapeDtypeStruct((B, N_FREQ, n_frames), jnp.float32),
        ),
        grid=(B, num_tiles),
        in_specs=[
            # per-tile block rows (first halves of the frames)
            pl.BlockSpec((None, tile_f, HOP_LENGTH), lambda b, i: (b, i, 0)),
            # first 8 block rows of the NEXT tile (row 0 is the carry block)
            pl.BlockSpec((None, 8, HOP_LENGTH),
                         lambda b, i: (b, (i + 1) * blocks_per_tile, 0)),
            # resident bases (constant index map -> not re-fetched per step)
            pl.BlockSpec((2 * N_FREQ_PAD, HOP_LENGTH), lambda b, i: (0, 0)),
            pl.BlockSpec((2 * N_FREQ_PAD, HOP_LENGTH), lambda b, i: (0, 0)),
        ],
        out_specs=(
            pl.BlockSpec((None, N_FREQ, tile_f), lambda b, i: (b, 0, i)),
            pl.BlockSpec((None, N_FREQ, tile_f), lambda b, i: (b, 0, i)),
        ),
        compiler_params=pltpu.CompilerParams(
            dimension_semantics=("parallel", "parallel"),
        ),
    )(blocks, blocks, _BT_TOP, _BT_BOT)
    return mag, phase


# ----------------------------- main ------------------------------------------
if __name__ == "__main__":
    key = jax.random.PRNGKey(0)
    B = 2
    T = 8 * HOP_LENGTH                     # 1216 samples -> T' = 9 frames
    audio = jax.random.normal(key, (B, T), dtype=jnp.float32)

    magnitude, phase = spectrogram_forward(audio)
    jax.block_until_ready((magnitude, phase))

    n_frames = T // HOP_LENGTH + 1
    assert magnitude.shape == (B, N_FREQ, n_frames)
    assert phase.shape == (B, N_FREQ, n_frames)

    # Host-side NumPy reference (identical to torchaudio defaults).
    a = np.pad(np.asarray(audio, dtype=np.float64),
               ((0, 0), (N_FFT // 2, N_FFT // 2)), mode="reflect")
    n = np.arange(WIN_LENGTH)
    win = 0.5 - 0.5 * np.cos(2.0 * np.pi * n / WIN_LENGTH)
    ref = np.empty((B, N_FREQ, n_frames), dtype=np.complex128)
    for f in range(n_frames):
        seg = a[:, f * HOP_LENGTH:f * HOP_LENGTH + N_FFT] * win[None, :]
        ref[:, :, f] = np.fft.rfft(seg, n=N_FFT, axis=-1)

    got = np.asarray(magnitude) * np.exp(1j * np.asarray(phase))
    err = np.max(np.abs(got - ref)) / np.max(np.abs(ref))
    assert err < 5e-2, f"max relative error too large: {err}"

    print("KERNEL_OK")
</pallas_src>

<mosaic_0001>
module attributes {stable_mosaic.version = 11 : i64} {
  func.func @_spectrogram_kernel(%arg0: i32, %arg1: i32, %arg2: memref<1x128x152xf32, #tpu.memory_space<vmem>>, %arg3: memref<1x8x152xf32, #tpu.memory_space<vmem>>, %arg4: memref<320x152xf32, #tpu.memory_space<vmem>>, %arg5: memref<320x152xf32, #tpu.memory_space<vmem>>, %arg6: memref<1x153x128xf32, #tpu.memory_space<vmem>>, %arg7: memref<1x153x128xf32, #tpu.memory_space<vmem>>) attributes {dimension_semantics = [#tpu.dimension_semantics<parallel>, #tpu.dimension_semantics<parallel>], iteration_bounds = array<i64: 2, 1>, scalar_prefetch = 0 : i64, scratch_operands = 0 : i64, tpu.core_type = #tpu.core_type<tc>, window_params = [{transform_indices = @transform_0, window_bounds = array<i64: 1, 128, 152>}, {transform_indices = @transform_1, window_bounds = array<i64: 1, 8, 152>}, {pipeline_mode = #tpu.pipeline_mode<synchronous>, transform_indices = @transform_2, window_bounds = array<i64: 320, 152>}, {pipeline_mode = #tpu.pipeline_mode<synchronous>, transform_indices = @transform_3, window_bounds = array<i64: 320, 152>}, {transform_indices = @transform_4, window_bounds = array<i64: 1, 153, 128>}, {transform_indices = @transform_5, window_bounds = array<i64: 1, 153, 128>}]} {
    %c0 = arith.constant 0 : index
    %c0_0 = arith.constant 0 : index
    %c0_1 = arith.constant 0 : index
    %0 = vector.load %arg2[%c0, %c0_0, %c0_1] : memref<1x128x152xf32, #tpu.memory_space<vmem>>, vector<1x128x152xf32>
    %1 = vector.shape_cast %0 : vector<1x128x152xf32> to vector<128x152xf32>
    %c0_2 = arith.constant 0 : index
    %c0_3 = arith.constant 0 : index
    %c0_4 = arith.constant 0 : index
    %2 = vector.load %arg3[%c0_2, %c0_3, %c0_4] : memref<1x8x152xf32, #tpu.memory_space<vmem>>, vector<1x8x152xf32>
    %3 = vector.shape_cast %2 : vector<1x8x152xf32> to vector<8x152xf32>
    %4 = tpu.concatenate %1, %3 in 0 : vector<128x152xf32>, vector<8x152xf32> -> vector<136x152xf32>
    %5 = vector.extract_strided_slice %4 {offsets = [1, 0], sizes = [128, 152], strides = [1, 1]} : vector<136x152xf32> to vector<128x152xf32>
    %c0_5 = arith.constant 0 : index
    %c0_6 = arith.constant 0 : index
    %6 = vector.load %arg4[%c0_5, %c0_6] : memref<320x152xf32, #tpu.memory_space<vmem>>, vector<320x152xf32>
    %cst = arith.constant dense<0.000000e+00> : vector<320x128xf32>
    %7 = tpu.matmul %6, %1, %cst {dimension_numbers = #tpu.dot_dimension_numbers<[1], [1], [0], [0], [0, 0, 1, 0], [], []>} : vector<320x152xf32>, vector<128x152xf32>, vector<320x128xf32> -> vector<320x128xf32>
    %c0_7 = arith.constant 0 : index
    %c0_8 = arith.constant 0 : index
    %8 = vector.load %arg5[%c0_7, %c0_8] : memref<320x152xf32, #tpu.memory_space<vmem>>, vector<320x152xf32>
    %cst_9 = arith.constant dense<0.000000e+00> : vector<320x128xf32>
    %9 = tpu.matmul %8, %5, %cst_9 {dimension_numbers = #tpu.dot_dimension_numbers<[1], [1], [0], [0], [0, 0, 1, 0], [], []>} : vector<320x152xf32>, vector<128x152xf32>, vector<320x128xf32> -> vector<320x128xf32>
    %10 = arith.addf %7, %9 : vector<320x128xf32>
    %11 = vector.extract_strided_slice %10 {offsets = [0, 0], sizes = [153, 128], strides = [1, 1]} : vector<320x128xf32> to vector<153x128xf32>
    %12 = vector.extract_strided_slice %10 {offsets = [160, 0], sizes = [153, 128], strides = [1, 1]} : vector<320x128xf32> to vector<153x128xf32>
    %13 = arith.mulf %11, %11 : vector<153x128xf32>
    %14 = arith.mulf %12, %12 : vector<153x128xf32>
    %15 = arith.addf %13, %14 : vector<153x128xf32>
    %16 = math.sqrt %15 : vector<153x128xf32>
    %c0_10 = arith.constant 0 : index
    %c0_11 = arith.constant 0 : index
    %c0_12 = arith.constant 0 : index
    %17 = vector.load %arg6[%c0_10, %c0_11, %c0_12] : memref<1x153x128xf32, #tpu.memory_space<vmem>>, vector<1x153x128xf32>
    %18 = vector.shape_cast %17 : vector<1x153x128xf32> to vector<153x128xf32>
    %19 = vector.shape_cast %16 : vector<153x128xf32> to vector<1x153x128xf32>
    tpu.vector_store %arg6[%c0_10, %c0_11, %c0_12], %19 {strides = array<i32>} : memref<1x153x128xf32, #tpu.memory_space<vmem>>, vector<1x153x128xf32>,
    %20 = math.atan2 %12, %11 : vector<153x128xf32>
    %c0_13 = arith.constant 0 : index
    %c0_14 = arith.constant 0 : index
    %c0_15 = arith.constant 0 : index
    %21 = vector.load %arg7[%c0_13, %c0_14, %c0_15] : memref<1x153x128xf32, #tpu.memory_space<vmem>>, vector<1x153x128xf32>
    %22 = vector.shape_cast %21 : vector<1x153x128xf32> to vector<153x128xf32>
    %23 = vector.shape_cast %20 : vector<153x128xf32> to vector<1x153x128xf32>
    tpu.vector_store %arg7[%c0_13, %c0_14, %c0_15], %23 {strides = array<i32>} : memref<1x153x128xf32, #tpu.memory_space<vmem>>, vector<1x153x128xf32>,
    return
  }
  func.func @transform_0(%arg0: i32, %arg1: i32) -> (i32, i32, i32) {
    %c0_i32 = arith.constant 0 : i32
    %c0_i32_0 = arith.constant 0 : i32
    return %arg0, %arg1, %c0_i32 : i32, i32, i32
  }
  func.func @transform_1(%arg0: i32, %arg1: i32) -> (i32, i32, i32) {
    %c1_i32 = arith.constant 1 : i32
    %0 = arith.addi %arg1, %c1_i32 : i32
    %c16_i32 = arith.constant 16 : i32
    %1 = arith.muli %0, %c16_i32 : i32
    %c0_i32 = arith.constant 0 : i32
    %c0_i32_0 = arith.constant 0 : i32
    return %arg0, %1, %c0_i32 : i32, i32, i32
  }
  func.func @transform_2(%arg0: i32, %arg1: i32) -> (i32, i32) {
    %c0_i32 = arith.constant 0 : i32
    %c0_i32_0 = arith.constant 0 : i32
    %c0_i32_1 = arith.constant 0 : i32
    return %c0_i32, %c0_i32_0 : i32, i32
  }
  func.func @transform_3(%arg0: i32, %arg1: i32) -> (i32, i32) {
    %c0_i32 = arith.constant 0 : i32
    %c0_i32_0 = arith.constant 0 : i32
    %c0_i32_1 = arith.constant 0 : i32
    return %c0_i32, %c0_i32_0 : i32, i32
  }
  func.func @transform_4(%arg0: i32, %arg1: i32) -> (i32, i32, i32) {
    %c0_i32 = arith.constant 0 : i32
    %c0_i32_0 = arith.constant 0 : i32
    return %arg0, %c0_i32, %arg1 : i32, i32, i32
  }
  func.func @transform_5(%arg0: i32, %arg1: i32) -> (i32, i32, i32) {
    %c0_i32 = arith.constant 0 : i32
    %c0_i32_0 = arith.constant 0 : i32
    return %arg0, %c0_i32, %arg1 : i32, i32, i32
  }
}

</mosaic_0001>

<llo_original>
// kernel: reverse.1
$region0: #{reverse.1}
  %s0 = inlined_call_operand.vmem [shape: f32[2,256], index: 0, kind: input, shape index: {}]
  %s1 = inlined_call_operand.vmem [shape: f32[2,256], index: 1, kind: output, shape index: {}]
  %v2 = vlaneseq
  %v3 = vsub.s32 127, %v2
  %4 = vset.pattern.permute.xlu0 %v3
  $region1: #{reverse.1} parent=0
    #allocation0 [shape = 'u8[4096]{0}', space=vmem, size = 0x1000, scoped, tag = 'operand span for operand 0']
    #allocation1 [shape = 'u8[2048]{0}', space=vmem, size = 0x800, scoped, tag = 'packed  for operand 0']
    #allocation2 [shape = 'u8[4096]{0}', space=vmem, size = 0x1000, scoped, tag = 'operand span for operand 1']
    #allocation3 [shape = 'u8[2048]{0}', space=vmem, size = 0x800, scoped, tag = 'packed  for operand 1']
    loop: start=0, step=1, limit=4
    $region2: #{reverse.1} parent=1 // loop_pre_header
      _
    $region3: #{reverse.1} parent=1 // loop_header
      %s6 = sphi 0, %s10
      %p7 = scmp.ge.s32.totalorder %s6, 4
      %s13 = sphi 0, %s25
      %s14 = sphi 0, %s21
      %s15 = sphi 0, %s13
      %s16 = sphi 0, %s14
      %s17 = sphi 0, %s15
      %s18 = sphi 0, %s16
    $region4: #{reverse.1} parent=1 // loop_header_branch
      %9 = sbr.rel (%p7) target = $region8
    $region5: #{reverse.1} parent=1 // loop_body
      %s11 = ssub.s32 %s6, 1
      %s12 = ssub.s32 %s6, 2
      %s19 = sadd.s32 1, %s14
      %p20 = scmp.ge.s32.totalorder %s19, 2
      %s21 = scalar_select %p20, 0, %s19
      %s22 = sadd.s32 1, %s13
      %s23 = scalar_select %p20, %s22, %s13
      %p24 = scmp.ge.s32.totalorder %s23, 1
      %s25 = scalar_select %p24, 0, %s23
      %p26 = scmp.le.s32.totalorder 1, %s6
      %p27 = scmp.lt.s32.totalorder %s6, 3
      %p28 = pnand %p26, %p27
      %p29 = pneg %p28
      // Predicated region
      $region9: #{reverse.1} parent=5 // pred_check
        _
      $region10: #{reverse.1} parent=5 // pred_check_branch
        %31 = sbr.rel (%p28) target = $region12
      $region11: #{reverse.1} parent=5 // pred_region
        %s32 = ssub.s32 %s6, 1
      $region12: #{reverse.1} parent=5 // pred_fallthru
        _
      %p33 = scmp.lt.s32.totalorder %s6, 2
      // Predicated region
      $region13: #{reverse.1} parent=5 // pred_check
        %p34 = pneg %p33
      $region14: #{reverse.1} parent=5 // pred_check_branch
        %36 = sbr.rel (%p34) target = $region16
      $region15: #{reverse.1} parent=5 // pred_region
        %s37 = sand.u32 %s6, 1
        %s38 = sand.u32 %s6, 1
        %s39 = smul.addr %s38, 2
        %s40 = scalar_lea.vmem [#allocation1], %s39
        %s41 = ssub.s32 1, %s14
        %s42 = smul.addr %s13, 2
        %s43 = sadd.s32 %s41, %s42
        %s44 = smul.addr %s43, 2
        %s45 = scalar_lea.vmem %s0, %s44
        // Predicated region
        $region17: #{reverse.1} parent=15 // pred_check
          _
        $region18: #{reverse.1} parent=15 // pred_check_branch
          %47 = sbr.rel (0) target = $region20
        $region19: #{reverse.1} parent=15 // pred_region
          // Predicated region
          $region21: #{reverse.1} parent=19 // pred_check
            _
          $region22: #{reverse.1} parent=19 // pred_check_branch
            %49 = sbr.rel target = $region24
          $region23: #{reverse.1} parent=19 // pred_region
            // Predicated region
            $region36: #{reverse.1} parent=23 // pred_check
              _
            $region37: #{reverse.1} parent=23 // pred_check_branch
              %65 = sbr.rel (0) target = $region39
            $region38: #{reverse.1} parent=23 // pred_region
              %s67 = ssub.s32 4, 1
              loop: start=0, step=1, limit=1
              $region40: #{reverse.1} parent=38 // loop_pre_header
                _
              $region41: #{reverse.1} parent=38 // loop_header
                %s69 = sphi 0, %s73
                %p70 = scmp.ge.s32.totalorder %s69, 1
                %s74 = sphi %s45, %s45
                %s75 = sphi %s40, %s40
              $region42: #{reverse.1} parent=38 // loop_header_branch
                %72 = sbr.rel (%p70) target = $region46
              $region43: #{reverse.1} parent=38 // loop_body
                %v76 = vld [vmem:[%s74] sm:%s67]
                %77 = vst [vmem:[%s75] sm:%s67] %v76
              $region44: #{reverse.1} parent=38 // loop_footer
                %s73 = sadd.s32 1, %s69
              $region45: #{reverse.1} parent=38 // loop_footer_branch
                %68 = sbr.rel target = $region41
              $region46: #{reverse.1} parent=38 // loop_exit
                _
            $region39: #{reverse.1} parent=23 // pred_fallthru
              _
          $region24: #{reverse.1} parent=19 // pred_fallthru
            _
          // Predicated region
          $region25: #{reverse.1} parent=19 // pred_check
            _
          $region26: #{reverse.1} parent=19 // pred_check_branch
            %51 = sbr.rel (0) target = $region28
          $region27: #{reverse.1} parent=19 // pred_region
            %s53 = ssub.s32 4, 1
            loop: start=0, step=1, limit=1
            $region29: #{reverse.1} parent=27 // loop_pre_header
              _
            $region30: #{reverse.1} parent=27 // loop_header
              %s55 = sphi 0, %s59
              %p56 = scmp.ge.s32.totalorder %s55, 1
              %s60 = sphi %s45, %s45
              %s61 = sphi %s40, %s40
            $region31: #{reverse.1} parent=27 // loop_header_branch
              %58 = sbr.rel (%p56) target = $region35
            $region32: #{reverse.1} parent=27 // loop_body
              %v62 = vld [vmem:[%s60] sm:%s53]
              %63 = vst [vmem:[%s61] sm:%s53] %v62
            $region33: #{reverse.1} parent=27 // loop_footer
              %s59 = sadd.s32 1, %s55
            $region34: #{reverse.1} parent=27 // loop_footer_branch
              %54 = sbr.rel target = $region30
            $region35: #{reverse.1} parent=27 // loop_exit
              _
          $region28: #{reverse.1} parent=19 // pred_fallthru
            _
        $region20: #{reverse.1} parent=15 // pred_fallthru
          _
        %78 = vnop
      $region16: #{reverse.1} parent=5 // pred_fallthru
        _
      %p79 = scmp.le.s32.totalorder 1, %s6
      %p80 = scmp.lt.s32.totalorder %s6, 3
      %p81 = pnand %p79, %p80
      %p82 = pneg %p81
      // Predicated region
      $region47: #{reverse.1} parent=5 // pred_check
        _
      $region48: #{reverse.1} parent=5 // pred_check_branch
        %84 = sbr.rel (%p81) target = $region50
      $region49: #{reverse.1} parent=5 // pred_region
        %s85 = ssub.s32 %s6, 1
        %s86 = sand.u32 %s11, 1
        %s87 = sand.u32 %s11, 1
        %s88 = smul.addr %s87, 2
        %s89 = scalar_lea.vmem [#allocation1], %s88
        %s90 = sand.u32 %s11, 1
        %s91 = sand.u32 %s11, 1
        %s92 = smul.addr %s91, 2
        %s93 = scalar_lea.vmem [#allocation1], %s92
        %s94 = sand.u32 %s11, 1
        %s95 = sand.u32 %s11, 1
        %s96 = smul.addr %s95, 2
        %s97 = scalar_lea.vmem [#allocation3], %s96
        %s99 = sshll.u32 1, 2
        %s100 = ssub.s32 %s99, 1
        %v101 = vld [vmem:[%s93] sm:%s100]
        %102 = vst [vmem:[#allocation0] sm:%s100] %v101
        %s103 = ssub.s32 1, %s16
        %v104 = vld [vmem:[#allocation0] sm:$0xff]
        %105 = vperm.xlu0 %4, %v104
        %v106 = vpop.permute.xlu0 %105
        %107 = vst [vmem:[#allocation2] sm:$0xff] %v106
        %s109 = sshll.u32 1, 2
        %s110 = ssub.s32 %s109, 1
        %v112 = vld [vmem:[#allocation2] sm:%s110]
        %s113 = sshll.u32 1, 2
        %s114 = ssub.s32 %s113, 1
        %115 = vst [vmem:[%s97] sm:%s114] %v112
        %s116 = sand.u32 %s11, 1
        %s117 = sand.u32 %s11, 1
        %s118 = smul.addr %s117, 2
        %s119 = scalar_lea.vmem [#allocation3], %s118
        %s120 = smul.addr %s15, 2
        %s121 = sadd.s32 %s16, %s120
        %s122 = smul.addr %s121, 2
        %s123 = scalar_lea.vmem %s1, %s122
        // Predicated region
        $region51: #{reverse.1} parent=49 // pred_check
          _
        $region52: #{reverse.1} parent=49 // pred_check_branch
          %125 = sbr.rel (0) target = $region54
        $region53: #{reverse.1} parent=49 // pred_region
          // Predicated region
          $region55: #{reverse.1} parent=53 // pred_check
            _
          $region56: #{reverse.1} parent=53 // pred_check_branch
            %127 = sbr.rel target = $region58
          $region57: #{reverse.1} parent=53 // pred_region
            // Predicated region
            $region70: #{reverse.1} parent=57 // pred_check
              _
            $region71: #{reverse.1} parent=57 // pred_check_branch
              %143 = sbr.rel (0) target = $region73
            $region72: #{reverse.1} parent=57 // pred_region
              %s145 = ssub.s32 4, 1
              loop: start=0, step=1, limit=1
              $region74: #{reverse.1} parent=72 // loop_pre_header
                _
              $region75: #{reverse.1} parent=72 // loop_header
                %s147 = sphi 0, %s151
                %p148 = scmp.ge.s32.totalorder %s147, 1
                %s152 = sphi %s119, %s119
                %s153 = sphi %s123, %s123
              $region76: #{reverse.1} parent=72 // loop_header_branch
                %150 = sbr.rel (%p148) target = $region80
              $region77: #{reverse.1} parent=72 // loop_body
                %v154 = vld [vmem:[%s152] sm:%s145]
                %155 = vst [vmem:[%s153] sm:%s145] %v154
              $region78: #{reverse.1} parent=72 // loop_footer
                %s151 = sadd.s32 1, %s147
              $region79: #{reverse.1} parent=72 // loop_footer_branch
                %146 = sbr.rel target = $region75
              $region80: #{reverse.1} parent=72 // loop_exit
                _
            $region73: #{reverse.1} parent=57 // pred_fallthru
              _
          $region58: #{reverse.1} parent=53 // pred_fallthru
            _
          // Predicated region
          $region59: #{reverse.1} parent=53 // pred_check
            _
          $region60: #{reverse.1} parent=53 // pred_check_branch
            %129 = sbr.rel (0) target = $region62
          $region61: #{reverse.1} parent=53 // pred_region
            %s131 = ssub.s32 4, 1
            loop: start=0, step=1, limit=1
            $region63: #{reverse.1} parent=61 // loop_pre_header
              _
            $region64: #{reverse.1} parent=61 // loop_header
              %s133 = sphi 0, %s137
              %p134 = scmp.ge.s32.totalorder %s133, 1
              %s138 = sphi %s119, %s119
              %s139 = sphi %s123, %s123
            $region65: #{reverse.1} parent=61 // loop_header_branch
              %136 = sbr.rel (%p134) target = $region69
            $region66: #{reverse.1} parent=61 // loop_body
              %v140 = vld [vmem:[%s138] sm:%s131]
              %141 = vst [vmem:[%s139] sm:%s131] %v140
            $region67: #{reverse.1} parent=61 // loop_footer
              %s137 = sadd.s32 1, %s133
            $region68: #{reverse.1} parent=61 // loop_footer_branch
              %132 = sbr.rel target = $region64
            $region69: #{reverse.1} parent=61 // loop_exit
              _
          $region62: #{reverse.1} parent=53 // pred_fallthru
            _
        $region54: #{reverse.1} parent=49 // pred_fallthru
          _
        %156 = vnop
      $region50: #{reverse.1} parent=5 // pred_fallthru
        _
      %p157 = scmp.le.s32.totalorder 2, %s6
      // Predicated region
      $region81: #{reverse.1} parent=5 // pred_check
        %p158 = pneg %p157
      $region82: #{reverse.1} parent=5 // pred_check_branch
        %160 = sbr.rel (%p158) target = $region84
      $region83: #{reverse.1} parent=5 // pred_region
        %s161 = ssub.s32 %s6, 2
        %s162 = sand.u32 %s12, 1
        %s163 = sand.u32 %s12, 1
        %s164 = smul.addr %s163, 2
        %s165 = scalar_lea.vmem [#allocation3], %s164
      $region84: #{reverse.1} parent=5 // pred_fallthru
        _
    $region6: #{reverse.1} parent=1 // loop_footer
      %s10 = sadd.s32 1, %s6
    $region7: #{reverse.1} parent=1 // loop_footer_branch
      %5 = sbr.rel target = $region3
    $region8: #{reverse.1} parent=1 // loop_exit
      _

// kernel: spectrogram_forward.1
$region0: #{spectrogram_forward.1}
  #allocation0 [shape = 'u32[]', space=smem, size = 0x4, offset = 0x4, fixed_abs, tag = 'smem constant byte address 0x4 - core index']
  #allocation1 [shape = 'u32[144,128]{1,0:T(1,128)}', space=vmem, size = 0x12000, scoped, tag = 'internal scratch']
  %s0 = inlined_call_operand.vmem [shape: f32[2,136,152], index: 0, kind: input, shape index: {}, may-alias: {0,1}]
  %s1 = inlined_call_operand.vmem [shape: f32[2,136,152], index: 1, kind: input, shape index: {}, may-alias: {0,1}]
  %s2 = inlined_call_operand.vmem [shape: f32[320,152], index: 2, kind: input, shape index: {}]
  %s3 = inlined_call_operand.vmem [shape: f32[320,152], index: 3, kind: input, shape index: {}]
  %s4 = inlined_call_operand.vmem [shape: f32[2,153,9], index: 4, kind: output, shape index: {0}]
  %s5 = inlined_call_operand.vmem [shape: f32[2,153,9], index: 5, kind: output, shape index: {1}]
  %6 = xla_tuple %s4, %s5
  %s7 = sld [smem:[#allocation0]]
  $region57: #{spectrogram_forward.1} parent=0
    _
  %s9 = ssub.s32 1, %s7
  %s10 = scalar_select 0, %s9, %s7
  loop: start=0, step=1, limit=4
  $region2: #{spectrogram_forward.1} parent=0 // loop_pre_header
    _
  $region3: #{spectrogram_forward.1} parent=0 // loop_header
    %s12 = sphi 0, %s16
    %p13 = scmp.ge.s32.totalorder %s12, 4
    %s19 = sphi 0, %s31
    %s20 = sphi 0, %s27
    %s21 = sphi 0, %s19
    %s22 = sphi 0, %s20
    %s23 = sphi 0, %s21
    %s24 = sphi 0, %s22
    %s36 = sphi 0, %s38
    %s39 = sphi 0, %s36
    %s40 = sphi 0, %s39
    %s56 = sphi 0, %s40
    %s68 = sphi 0, %s70
    %s71 = sphi 0, %s68
    %s72 = sphi 0, %s71
    %s88 = sphi 0, %s72
    %s92 = sphi 0, %s92
    %s94 = sphi 0, %s92
    %s95 = sphi 0, %s94
    %s109 = sphi 0, %s95
    %s113 = sphi 0, %s113
    %s115 = sphi 0, %s113
    %s116 = sphi 0, %s115
    %s130 = sphi 0, %s116
    %s138 = sphi 0, %s140
    %s141 = sphi 0, %s138
    %s142 = sphi 0, %s141
    %s158 = sphi 0, %s142
    %s166 = sphi 0, %s168
    %s169 = sphi 0, %s166
    %s170 = sphi 0, %s169
    %s186 = sphi 0, %s170
  $region4: #{spectrogram_forward.1} parent=0 // loop_header_branch
    %15 = sbr.rel (%p13) target = $region8
  $region5: #{spectrogram_forward.1} parent=0 // loop_body
    %s17 = ssub.s32 %s12, 1
    %s18 = ssub.s32 %s12, 2
    %s25 = sadd.s32 1, %s20
    %p26 = scmp.ge.s32.totalorder %s25, 1
    %s27 = scalar_select %p26, 0, %s25
    %s28 = sadd.s32 1, %s19
    %s29 = scalar_select %p26, %s28, %s19
    %p30 = scmp.ge.s32.totalorder %s29, 2
    %s31 = scalar_select %p30, 0, %s29
    %s32 = ssub.s32 %s19, %s31
    %s33 = ssub.s32 %s20, %s27
    %s34 = sor.u32 %s32, %s33
    %p35 = scmp.eq.s32.totalorder %s34, 0
    %s37 = sadd.s32 %s36, 1
    %s38 = scalar_select %p35, %s36, %s37
    %p41 = pneg %p35
    %p42 = scmp.eq.s32.totalorder %s12, 1
    %p43 = por %p41, %p42
    %p44 = scmp.ne.s32.totalorder %s36, %s39
    %p45 = scmp.eq.s32.totalorder %s12, 0
    %p46 = por %p44, %p45
    %p47 = scmp.ne.s32.totalorder %s36, %s39
    %p48 = scmp.eq.s32.totalorder %s17, 1
    %p49 = por %p47, %p48
    %p50 = scmp.ne.s32.totalorder %s39, %s40
    %p51 = scmp.eq.s32.totalorder %s17, 0
    %p52 = por %p50, %p51
    %p53 = scmp.ne.s32.totalorder %s39, %s40
    %p54 = scmp.eq.s32.totalorder %s18, 1
    %p55 = por %p53, %p54
    %p57 = scmp.ne.s32.totalorder %s40, %s56
    %p58 = scmp.eq.s32.totalorder %s18, 0
    %p59 = por %p57, %p58
    %s60 = sadd.s32 %s20, 1
    %s61 = smul.u32 %s60, 16
    %s62 = sadd.s32 %s27, 1
    %s63 = smul.u32 %s62, 16
    %s64 = ssub.s32 %s19, %s31
    %s65 = ssub.s32 %s61, %s63
    %s66 = sor.u32 %s64, %s65
    %p67 = scmp.eq.s32.totalorder %s66, 0
    %s69 = sadd.s32 %s68, 1
    %s70 = scalar_select %p67, %s68, %s69
    %p73 = pneg %p67
    %p74 = scmp.eq.s32.totalorder %s12, 1
    %p75 = por %p73, %p74
    %p76 = scmp.ne.s32.totalorder %s68, %s71
    %p77 = scmp.eq.s32.totalorder %s12, 0
    %p78 = por %p76, %p77
    %p79 = scmp.ne.s32.totalorder %s68, %s71
    %p80 = scmp.eq.s32.totalorder %s17, 1
    %p81 = por %p79, %p80
    %p82 = scmp.ne.s32.totalorder %s71, %s72
    %p83 = scmp.eq.s32.totalorder %s17, 0
    %p84 = por %p82, %p83
    %p85 = scmp.ne.s32.totalorder %s71, %s72
    %p86 = scmp.eq.s32.totalorder %s18, 1
    %p87 = por %p85, %p86
    %p89 = scmp.ne.s32.totalorder %s72, %s88
    %p90 = scmp.eq.s32.totalorder %s18, 0
    %p91 = por %p89, %p90
    %s93 = sadd.s32 %s92, 1
    %p96 = scmp.eq.s32.totalorder %s12, 1
    %p97 = scmp.ne.s32.totalorder %s92, %s94
    %p98 = scmp.eq.s32.totalorder %s12, 0
    %p99 = por %p97, %p98
    %p100 = scmp.ne.s32.totalorder %s92, %s94
    %p101 = scmp.eq.s32.totalorder %s17, 1
    %p102 = por %p100, %p101
    %p103 = scmp.ne.s32.totalorder %s94, %s95
    %p104 = scmp.eq.s32.totalorder %s17, 0
    %p105 = por %p103, %p104
    %p106 = scmp.ne.s32.totalorder %s94, %s95
    %p107 = scmp.eq.s32.totalorder %s18, 1
    %p108 = por %p106, %p107
    %p110 = scmp.ne.s32.totalorder %s95, %s109
    %p111 = scmp.eq.s32.totalorder %s18, 0
    %p112 = por %p110, %p111
    %s114 = sadd.s32 %s113, 1
    %p117 = scmp.eq.s32.totalorder %s12, 1
    %p118 = scmp.ne.s32.totalorder %s113, %s115
    %p119 = scmp.eq.s32.totalorder %s12, 0
    %p120 = por %p118, %p119
    %p121 = scmp.ne.s32.totalorder %s113, %s115
    %p122 = scmp.eq.s32.totalorder %s17, 1
    %p123 = por %p121, %p122
    %p124 = scmp.ne.s32.totalorder %s115, %s116
    %p125 = scmp.eq.s32.totalorder %s17, 0
    %p126 = por %p124, %p125
    %p127 = scmp.ne.s32.totalorder %s115, %s116
    %p128 = scmp.eq.s32.totalorder %s18, 1
    %p129 = por %p127, %p128
    %p131 = scmp.ne.s32.totalorder %s116, %s130
    %p132 = scmp.eq.s32.totalorder %s18, 0
    %p133 = por %p131, %p132
    %s134 = ssub.s32 %s19, %s31
    %s135 = ssub.s32 %s20, %s27
    %s136 = sor.u32 %s134, %s135
    %p137 = scmp.eq.s32.totalorder %s136, 0
    %s139 = sadd.s32 %s138, 1
    %s140 = scalar_select %p137, %s138, %s139
    %p143 = pneg %p137
    %p144 = scmp.eq.s32.totalorder %s12, 1
    %p145 = por %p143, %p144
    %p146 = scmp.ne.s32.totalorder %s138, %s141
    %p147 = scmp.eq.s32.totalorder %s12, 0
    %p148 = por %p146, %p147
    %p149 = scmp.ne.s32.totalorder %s138, %s141
    %p150 = scmp.eq.s32.totalorder %s17, 1
    %p151 = por %p149, %p150
    %p152 = scmp.ne.s32.totalorder %s141, %s142
    %p153 = scmp.eq.s32.totalorder %s17, 0
    %p154 = por %p152, %p153
    %p155 = scmp.ne.s32.totalorder %s141, %s142
    %p156 = scmp.eq.s32.totalorder %s18, 1
    %p157 = por %p155, %p156
    %p159 = scmp.ne.s32.totalorder %s142, %s158
    %p160 = scmp.eq.s32.totalorder %s18, 0
    %p161 = por %p159, %p160
    %s162 = ssub.s32 %s19, %s31
    %s163 = ssub.s32 %s20, %s27
    %s164 = sor.u32 %s162, %s163
    %p165 = scmp.eq.s32.totalorder %s164, 0
    %s167 = sadd.s32 %s166, 1
    %s168 = scalar_select %p165, %s166, %s167
    %p171 = pneg %p165
    %p172 = scmp.eq.s32.totalorder %s12, 1
    %p173 = por %p171, %p172
    %p174 = scmp.ne.s32.totalorder %s166, %s169
    %p175 = scmp.eq.s32.totalorder %s12, 0
    %p176 = por %p174, %p175
    %p177 = scmp.ne.s32.totalorder %s166, %s169
    %p178 = scmp.eq.s32.totalorder %s17, 1
    %p179 = por %p177, %p178
    %p180 = scmp.ne.s32.totalorder %s169, %s170
    %p181 = scmp.eq.s32.totalorder %s17, 0
    %p182 = por %p180, %p181
    %p183 = scmp.ne.s32.totalorder %s169, %s170
    %p184 = scmp.eq.s32.totalorder %s18, 1
    %p185 = por %p183, %p184
    %p187 = scmp.ne.s32.totalorder %s170, %s186
    %p188 = scmp.eq.s32.totalorder %s18, 0
    %p189 = por %p187, %p188
    %p190 = scmp.le.s32.totalorder 1, %s12
    %p191 = scmp.lt.s32.totalorder %s12, 3
    %p192 = pnand %p190, %p191
    %p193 = pneg %p192
    // Predicated region
    $region9: #{spectrogram_forward.1} parent=5 // pred_check
      _
    $region10: #{spectrogram_forward.1} parent=5 // pred_check_branch
      %195 = sbr.rel (%p192) target = $region12
    $region11: #{spectrogram_forward.1} parent=5 // pred_region
      %s196 = ssub.s32 %s12, 1
      // Predicated region
      $region13: #{spectrogram_forward.1} parent=11 // pred_check
        %p197 = pneg %p105
      $region14: #{spectrogram_forward.1} parent=11 // pred_check_branch
        %199 = sbr.rel (%p197) target = $region16
      $region15: #{spectrogram_forward.1} parent=11 // pred_region
        _
      $region16: #{spectrogram_forward.1} parent=11 // pred_fallthru
        _
      // Predicated region
      $region17: #{spectrogram_forward.1} parent=11 // pred_check
        %p200 = pneg %p126
      $region18: #{spectrogram_forward.1} parent=11 // pred_check_branch
        %202 = sbr.rel (%p200) target = $region20
      $region19: #{spectrogram_forward.1} parent=11 // pred_region
        _
      $region20: #{spectrogram_forward.1} parent=11 // pred_fallthru
        _
    $region12: #{spectrogram_forward.1} parent=5 // pred_fallthru
      _
    %p203 = scmp.lt.s32.totalorder %s12, 2
    // Predicated region
    $region21: #{spectrogram_forward.1} parent=5 // pred_check
      %p204 = pneg %p203
    $region22: #{spectrogram_forward.1} parent=5 // pred_check_branch
      %206 = sbr.rel (%p204) target = $region24
    $region23: #{spectrogram_forward.1} parent=5 // pred_region
      // Predicated region
      $region25: #{spectrogram_forward.1} parent=23 // pred_check
        %p207 = pneg %p46
      $region26: #{spectrogram_forward.1} parent=23 // pred_check_branch
        %209 = sbr.rel (%p207) target = $region28
      $region27: #{spectrogram_forward.1} parent=23 // pred_region
        %s210 = smul.u32 16, %s20
        %s211 = ssub.s32 17, %s210
        %p212 = scmp.lt.s32.totalorder %s211, 16
        %s213 = scalar_select %p212, %s211, 16
        %s214 = smul.u32 128, %s213
        %s215 = smul.u32 %s214, 2
        %p216 = scmp.lt.s32.totalorder %s19, 1
        %s217 = scalar_select %p216, %s19, 1
        %p218 = scmp.lt.s32.totalorder %s210, 16
        %s219 = scalar_select %p218, %s210, 16
        %s220 = smul.addr %s219, 2
        %s221 = smul.addr %s217, 34
        %s222 = sadd.s32 %s220, %s221
        %s223 = smul.addr %s222, 8
        %s224 = scalar_lea.vmem %s0, %s223
        %s225 = smul.u32 16, %s20
        %s226 = ssub.s32 17, %s225
        %p227 = scmp.lt.s32.totalorder %s226, 16
        %s228 = scalar_select %p227, %s226, 16
        %s229 = smul.u32 128, %s228
        %s230 = smul.u32 %s229, 2
      $region28: #{spectrogram_forward.1} parent=23 // pred_fallthru
        _
      // Predicated region
      $region29: #{spectrogram_forward.1} parent=23 // pred_check
        %p231 = pneg %p78
      $region30: #{spectrogram_forward.1} parent=23 // pred_check_branch
        %233 = sbr.rel (%p231) target = $region32
      $region31: #{spectrogram_forward.1} parent=23 // pred_region
        %s234 = sadd.s32 %s20, 1
        %s235 = smul.u32 %s234, 16
        %p236 = scmp.lt.s32.totalorder %s19, 1
        %s237 = scalar_select %p236, %s19, 1
        %p238 = scmp.lt.s32.totalorder %s235, 16
        %s239 = scalar_select %p238, %s235, 16
        %s240 = smul.addr %s239, 2
        %s241 = smul.addr %s237, 34
        %s242 = sadd.s32 %s240, %s241
        %s243 = smul.addr %s242, 8
        %s244 = scalar_lea.vmem %s1, %s243
        %s245 = sadd.s32 %s20, 1
        %s246 = smul.u32 %s245, 16
      $region32: #{spectrogram_forward.1} parent=23 // pred_fallthru
        _
    $region24: #{spectrogram_forward.1} parent=5 // pred_fallthru
      _
    %p247 = scmp.le.s32.totalorder 1, %s12
    %p248 = scmp.lt.s32.totalorder %s12, 3
    %p249 = pnand %p247, %p248
    %p250 = pneg %p249
    // Predicated region
    $region33: #{spectrogram_forward.1} parent=5 // pred_check
      _
    $region34: #{spectrogram_forward.1} parent=5 // pred_check_branch
      %252 = sbr.rel (%p249) target = $region36
    $region35: #{spectrogram_forward.1} parent=5 // pred_region
      %s253 = ssub.s32 %s12, 1
      %s254 = smul.u32 16, %s22
      %s255 = ssub.s32 17, %s254
      %p256 = scmp.lt.s32.totalorder %s255, 16
      %s257 = scalar_select %p256, %s255, 16
      %s258 = smul.u32 128, %s257
      %s259 = smul.u32 %s258, 2
      %p260 = scmp.lt.s32.totalorder %s21, 1
      %s261 = scalar_select %p260, %s21, 1
      %p262 = scmp.lt.s32.totalorder %s254, 16
      %s263 = scalar_select %p262, %s254, 16
      %s264 = smul.addr %s263, 2
      %s265 = smul.addr %s261, 34
      %s266 = sadd.s32 %s264, %s265
      %s267 = smul.addr %s266, 8
      %s268 = scalar_lea.vmem %s0, %s267
      %p269 = pneg %p52
      %p270 = pneg %p49
      %s271 = sadd.s32 %s22, 1
      %s272 = smul.u32 %s271, 16
      %p273 = scmp.lt.s32.totalorder %s21, 1
      %s274 = scalar_select %p273, %s21, 1
      %p275 = scmp.lt.s32.totalorder %s272, 16
      %s276 = scalar_select %p275, %s272, 16
      %s277 = smul.addr %s276, 2
      %s278 = smul.addr %s274, 34
      %s279 = sadd.s32 %s277, %s278
      %s280 = smul.addr %s279, 8
      %s281 = scalar_lea.vmem %s1, %s280
      %p282 = pneg %p84
      %p283 = pneg %p81
      %p284 = pneg %p105
      %p285 = pneg %p102
      %p286 = pneg %p126
      %p287 = pneg %p123
      %p288 = pneg %p154
      %p289 = pneg %p151
      %p290 = scmp.lt.s32.totalorder %s21, 1
      %s291 = scalar_select %p290, %s21, 1
      %p292 = scmp.lt.s32.totalorder %s22, 0
      %s293 = scalar_select %p292, %s22, 0
      %s294 = smul.addr %s291, 20
      %s295 = sadd.s32 %s293, %s294
      %s296 = smul.addr %s295, 8
      %s297 = scalar_lea.vmem %s4, %s296
      %p298 = pneg %p182
      %p299 = pneg %p179
      %p300 = scmp.lt.s32.totalorder %s21, 1
      %s301 = scalar_select %p300, %s21, 1
      %p302 = scmp.lt.s32.totalorder %s22, 0
      %s303 = scalar_select %p302, %s22, 0
      %s304 = smul.addr %s301, 20
      %s305 = sadd.s32 %s303, %s304
      %s306 = smul.addr %s305, 8
      %s307 = scalar_lea.vmem %s5, %s306
      %s308 = smul.u32 16, %s22
      %s309 = ssub.s32 17, %s308
      %p310 = scmp.lt.s32.totalorder %s309, 16
      %s311 = scalar_select %p310, %s309, 16
      %s312 = smul.u32 128, %s311
      %s313 = smul.u32 %s312, 2
      %p314 = scmp.lt.s32.totalorder %s21, 1
      %s315 = scalar_select %p314, %s21, 1
      %p316 = scmp.lt.s32.totalorder %s308, 16
      %s317 = scalar_select %p316, %s308, 16
      %s318 = smul.addr %s317, 2
      %s319 = smul.addr %s315, 34
      %s320 = sadd.s32 %s318, %s319
      %s321 = smul.addr %s320, 8
      %s322 = scalar_lea.vmem %s0, %s321
      %s323 = smul.u32 16, %s22
      %s324 = ssub.s32 17, %s323
      %p325 = scmp.lt.s32.totalorder %s324, 16
      %s326 = scalar_select %p325, %s324, 16
      %s327 = smul.u32 128, %s326
      %s328 = smul.u32 %s327, 2
      %s329 = sadd.s32 %s22, 1
      %s330 = smul.u32 %s329, 16
      %p331 = scmp.lt.s32.totalorder %s21, 1
      %s332 = scalar_select %p331, %s21, 1
      %p333 = scmp.lt.s32.totalorder %s330, 16
      %s334 = scalar_select %p333, %s330, 16
      %s335 = smul.addr %s334, 2
      %s336 = smul.addr %s332, 34
      %s337 = sadd.s32 %s335, %s336
      %s338 = smul.addr %s337, 8
      %s339 = scalar_lea.vmem %s1, %s338
      %s340 = sadd.s32 %s22, 1
      %s341 = smul.u32 %s340, 16
      %p342 = scmp.lt.s32.totalorder %s21, 1
      %s343 = scalar_select %p342, %s21, 1
      %p344 = scmp.lt.s32.totalorder %s22, 0
      %s345 = scalar_select %p344, %s22, 0
      %s346 = smul.addr %s343, 20
      %s347 = sadd.s32 %s345, %s346
      %s348 = smul.addr %s347, 8
      %s349 = scalar_lea.vmem %s4, %s348
      %p350 = scmp.lt.s32.totalorder %s21, 1
      %s351 = scalar_select %p350, %s21, 1
      %p352 = scmp.lt.s32.totalorder %s22, 0
      %s353 = scalar_select %p352, %s22, 0
      %s354 = smul.addr %s351, 20
      %s355 = sadd.s32 %s353, %s354
      %s356 = smul.addr %s355, 8
      %s357 = scalar_lea.vmem %s5, %s356
      %v358 = vld [vmem:[%s322] sm:$0xff]
      %v359 = vld [vmem:[%s322 + $0x8] sm:$0xff]
      %v360 = vld [vmem:[%s322 + $0x10] sm:$0xff]
      %v361 = vld [vmem:[%s322 + $0x18] sm:$0xff]
      %v362 = vld [vmem:[%s322 + $0x20] sm:$0xff]
      %v363 = vld [vmem:[%s322 + $0x28] sm:$0xff]
      %v364 = vld [vmem:[%s322 + $0x30] sm:$0xff]
      %v365 = vld [vmem:[%s322 + $0x38] sm:$0xff]
      %v366 = vld [vmem:[%s322 + $0x40] sm:$0xff]
      %v367 = vld [vmem:[%s322 + $0x48] sm:$0xff]
      %v368 = vld [vmem:[%s322 + $0x50] sm:$0xff]
      %v369 = vld [vmem:[%s322 + $0x58] sm:$0xff]
      %v370 = vld [vmem:[%s322 + $0x60] sm:$0xff]
      %v371 = vld [vmem:[%s322 + $0x68] sm:$0xff]
      %v372 = vld [vmem:[%s322 + $0x70] sm:$0xff]
      %v373 = vld [vmem:[%s322 + $0x78] sm:$0xff]
      %v374 = vld [vmem:[%s322 + $0x80] sm:$0xff]
      %v375 = vld [vmem:[%s322 + $0x88] sm:$0xff]
      %v376 = vld [vmem:[%s322 + $0x90] sm:$0xff]
      %v377 = vld [vmem:[%s322 + $0x98] sm:$0xff]
      %v378 = vld [vmem:[%s322 + $0xa0] sm:$0xff]
      %v379 = vld [vmem:[%s322 + $0xa8] sm:$0xff]
      %v380 = vld [vmem:[%s322 + $0xb0] sm:$0xff]
      %v381 = vld [vmem:[%s322 + $0xb8] sm:$0xff]
      %v382 = vld [vmem:[%s322 + $0xc0] sm:$0xff]
      %v383 = vld [vmem:[%s322 + $0xc8] sm:$0xff]
      %v384 = vld [vmem:[%s322 + $0xd0] sm:$0xff]
      %v385 = vld [vmem:[%s322 + $0xd8] sm:$0xff]
      %v386 = vld [vmem:[%s322 + $0xe0] sm:$0xff]
      %v387 = vld [vmem:[%s322 + $0xe8] sm:$0xff]
      %v388 = vld [vmem:[%s322 + $0xf0] sm:$0xff]
      %v389 = vld [vmem:[%s322 + $0xf8] sm:$0xff]
      %v390 = vld [vmem:[%s339] sm:$0xff]
      %v391 = vld [vmem:[%s339 + $0x8] sm:$0xff]
      %v392 = vld [vmem:[%s2] sm:$0xff]
      %v393 = vld [vmem:[%s2 + $0x8] sm:$0xff]
      %v394 = vld [vmem:[%s2 + $0x10] sm:$0xff]
      %v395 = vld [vmem:[%s2 + $0x18] sm:$0xff]
      %v396 = vld [vmem:[%s2 + $0x20] sm:$0xff]
      %v397 = vld [vmem:[%s2 + $0x28] sm:$0xff]
      %v398 = vld [vmem:[%s2 + $0x30] sm:$0xff]
      %v399 = vld [vmem:[%s2 + $0x38] sm:$0xff]
      %v400 = vld [vmem:[%s2 + $0x40] sm:$0xff]
      %v401 = vld [vmem:[%s2 + $0x48] sm:$0xff]
      %v402 = vld [vmem:[%s2 + $0x50] sm:$0xff]
      %v403 = vld [vmem:[%s2 + $0x58] sm:$0xff]
      %v404 = vld [vmem:[%s2 + $0x60] sm:$0xff]
      %v405 = vld [vmem:[%s2 + $0x68] sm:$0xff]
      %v406 = vld [vmem:[%s2 + $0x70] sm:$0xff]
      %v407 = vld [vmem:[%s2 + $0x78] sm:$0xff]
      %v408 = vld [vmem:[%s2 + $0x80] sm:$0xff]
      %v409 = vld [vmem:[%s2 + $0x88] sm:$0xff]
      %v410 = vld [vmem:[%s2 + $0x90] sm:$0xff]
      %v411 = vld [vmem:[%s2 + $0x98] sm:$0xff]
      %v412 = vld [vmem:[%s2 + $0xa0] sm:$0xff]
      %v413 = vld [vmem:[%s2 + $0xa8] sm:$0xff]
      %v414 = vld [vmem:[%s2 + $0xb0] sm:$0xff]
      %v415 = vld [vmem:[%s2 + $0xb8] sm:$0xff]
      %v416 = vld [vmem:[%s2 + $0xc0] sm:$0xff]
      %v417 = vld [vmem:[%s2 + $0xc8] sm:$0xff]
      %v418 = vld [vmem:[%s2 + $0xd0] sm:$0xff]
      %v419 = vld [vmem:[%s2 + $0xd8] sm:$0xff]
      %v420 = vld [vmem:[%s2 + $0xe0] sm:$0xff]
      %v421 = vld [vmem:[%s2 + $0xe8] sm:$0xff]
      %v422 = vld [vmem:[%s2 + $0xf0] sm:$0xff]
      %v423 = vld [vmem:[%s2 + $0xf8] sm:$0xff]
      %v424 = vld [vmem:[%s2 + $0x100] sm:$0xff]
      %v425 = vld [vmem:[%s2 + $0x108] sm:$0xff]
      %v426 = vld [vmem:[%s2 + $0x110] sm:$0xff]
      %v427 = vld [vmem:[%s2 + $0x118] sm:$0xff]
      %v428 = vld [vmem:[%s2 + $0x120] sm:$0xff]
      %v429 = vld [vmem:[%s2 + $0x128] sm:$0xff]
      %v430 = vld [vmem:[%s2 + $0x130] sm:$0xff]
      %v431 = vld [vmem:[%s2 + $0x138] sm:$0xff]
      %v432 = vld [vmem:[%s2 + $0x140] sm:$0xff]
      %v433 = vld [vmem:[%s2 + $0x148] sm:$0xff]
      %v434 = vld [vmem:[%s2 + $0x150] sm:$0xff]
      %v435 = vld [vmem:[%s2 + $0x158] sm:$0xff]
      %v436 = vld [vmem:[%s2 + $0x160] sm:$0xff]
      %v437 = vld [vmem:[%s2 + $0x168] sm:$0xff]
      %v438 = vld [vmem:[%s2 + $0x170] sm:$0xff]
      %v439 = vld [vmem:[%s2 + $0x178] sm:$0xff]
      %v440 = vld [vmem:[%s2 + $0x180] sm:$0xff]
      %v441 = vld [vmem:[%s2 + $0x188] sm:$0xff]
      %v442 = vld [vmem:[%s2 + $0x190] sm:$0xff]
      %v443 = vld [vmem:[%s2 + $0x198] sm:$0xff]
      %v444 = vld [vmem:[%s2 + $0x1a0] sm:$0xff]
      %v445 = vld [vmem:[%s2 + $0x1a8] sm:$0xff]
      %v446 = vld [vmem:[%s2 + $0x1b0] sm:$0xff]
      %v447 = vld [vmem:[%s2 + $0x1b8] sm:$0xff]
      %v448 = vld [vmem:[%s2 + $0x1c0] sm:$0xff]
      %v449 = vld [vmem:[%s2 + $0x1c8] sm:$0xff]
      %v450 = vld [vmem:[%s2 + $0x1d0] sm:$0xff]
      %v451 = vld [vmem:[%s2 + $0x1d8] sm:$0xff]
      %v452 = vld [vmem:[%s2 + $0x1e0] sm:$0xff]
      %v453 = vld [vmem:[%s2 + $0x1e8] sm:$0xff]
      %v454 = vld [vmem:[%s2 + $0x1f0] sm:$0xff]
      %v455 = vld [vmem:[%s2 + $0x1f8] sm:$0xff]
      %v456 = vld [vmem:[%s2 + $0x200] sm:$0xff]
      %v457 = vld [vmem:[%s2 + $0x208] sm:$0xff]
      %v458 = vld [vmem:[%s2 + $0x210] sm:$0xff]
      %v459 = vld [vmem:[%s2 + $0x218] sm:$0xff]
      %v460 = vld [vmem:[%s2 + $0x220] sm:$0xff]
      %v461 = vld [vmem:[%s2 + $0x228] sm:$0xff]
      %v462 = vld [vmem:[%s2 + $0x230] sm:$0xff]
      %v463 = vld [vmem:[%s2 + $0x238] sm:$0xff]
      %v464 = vld [vmem:[%s2 + $0x240] sm:$0xff]
      %v465 = vld [vmem:[%s2 + $0x248] sm:$0xff]
      %v466 = vld [vmem:[%s2 + $0x250] sm:$0xff]
      %v467 = vld [vmem:[%s2 + $0x258] sm:$0xff]
      %v468 = vld [vmem:[%s2 + $0x260] sm:$0xff]
      %v469 = vld [vmem:[%s2 + $0x268] sm:$0xff]
      %v470 = vld [vmem:[%s2 + $0x270] sm:$0xff]
      %v471 = vld [vmem:[%s2 + $0x278] sm:$0xff]
      %v472 = vld [vmem:[%s3] sm:$0xff]
      %v473 = vld [vmem:[%s3 + $0x8] sm:$0xff]
      %v474 = vld [vmem:[%s3 + $0x10] sm:$0xff]
      %v475 = vld [vmem:[%s3 + $0x18] sm:$0xff]
      %v476 = vld [vmem:[%s3 + $0x20] sm:$0xff]
      %v477 = vld [vmem:[%s3 + $0x28] sm:$0xff]
      %v478 = vld [vmem:[%s3 + $0x30] sm:$0xff]
      %v479 = vld [vmem:[%s3 + $0x38] sm:$0xff]
      %v480 = vld [vmem:[%s3 + $0x40] sm:$0xff]
      %v481 = vld [vmem:[%s3 + $0x48] sm:$0xff]
      %v482 = vld [vmem:[%s3 + $0x50] sm:$0xff]
      %v483 = vld [vmem:[%s3 + $0x58] sm:$0xff]
      %v484 = vld [vmem:[%s3 + $0x60] sm:$0xff]
      %v485 = vld [vmem:[%s3 + $0x68] sm:$0xff]
      %v486 = vld [vmem:[%s3 + $0x70] sm:$0xff]
      %v487 = vld [vmem:[%s3 + $0x78] sm:$0xff]
      %v488 = vld [vmem:[%s3 + $0x80] sm:$0xff]
      %v489 = vld [vmem:[%s3 + $0x88] sm:$0xff]
      %v490 = vld [vmem:[%s3 + $0x90] sm:$0xff]
      %v491 = vld [vmem:[%s3 + $0x98] sm:$0xff]
      %v492 = vld [vmem:[%s3 + $0xa0] sm:$0xff]
      %v493 = vld [vmem:[%s3 + $0xa8] sm:$0xff]
      %v494 = vld [vmem:[%s3 + $0xb0] sm:$0xff]
      %v495 = vld [vmem:[%s3 + $0xb8] sm:$0xff]
      %v496 = vld [vmem:[%s3 + $0xc0] sm:$0xff]
      %v497 = vld [vmem:[%s3 + $0xc8] sm:$0xff]
      %v498 = vld [vmem:[%s3 + $0xd0] sm:$0xff]
      %v499 = vld [vmem:[%s3 + $0xd8] sm:$0xff]
      %v500 = vld [vmem:[%s3 + $0xe0] sm:$0xff]
      %v501 = vld [vmem:[%s3 + $0xe8] sm:$0xff]
      %v502 = vld [vmem:[%s3 + $0xf0] sm:$0xff]
      %v503 = vld [vmem:[%s3 + $0xf8] sm:$0xff]
      %v504 = vld [vmem:[%s3 + $0x100] sm:$0xff]
      %v505 = vld [vmem:[%s3 + $0x108] sm:$0xff]
      %v506 = vld [vmem:[%s3 + $0x110] sm:$0xff]
      %v507 = vld [vmem:[%s3 + $0x118] sm:$0xff]
      %v508 = vld [vmem:[%s3 + $0x120] sm:$0xff]
      %v509 = vld [vmem:[%s3 + $0x128] sm:$0xff]
      %v510 = vld [vmem:[%s3 + $0x130] sm:$0xff]
      %v511 = vld [vmem:[%s3 + $0x138] sm:$0xff]
      %v512 = vld [vmem:[%s3 + $0x140] sm:$0xff]
      %v513 = vld [vmem:[%s3 + $0x148] sm:$0xff]
      %v514 = vld [vmem:[%s3 + $0x150] sm:$0xff]
      %v515 = vld [vmem:[%s3 + $0x158] sm:$0xff]
      %v516 = vld [vmem:[%s3 + $0x160] sm:$0xff]
      %v517 = vld [vmem:[%s3 + $0x168] sm:$0xff]
      %v518 = vld [vmem:[%s3 + $0x170] sm:$0xff]
      %v519 = vld [vmem:[%s3 + $0x178] sm:$0xff]
      %v520 = vld [vmem:[%s3 + $0x180] sm:$0xff]
      %v521 = vld [vmem:[%s3 + $0x188] sm:$0xff]
      %v522 = vld [vmem:[%s3 + $0x190] sm:$0xff]
      %v523 = vld [vmem:[%s3 + $0x198] sm:$0xff]
      %v524 = vld [vmem:[%s3 + $0x1a0] sm:$0xff]
      %v525 = vld [vmem:[%s3 + $0x1a8] sm:$0xff]
      %v526 = vld [vmem:[%s3 + $0x1b0] sm:$0xff]
      %v527 = vld [vmem:[%s3 + $0x1b8] sm:$0xff]
      %v528 = vld [vmem:[%s3 + $0x1c0] sm:$0xff]
      %v529 = vld [vmem:[%s3 + $0x1c8] sm:$0xff]
      %v530 = vld [vmem:[%s3 + $0x1d0] sm:$0xff]
      %v531 = vld [vmem:[%s3 + $0x1d8] sm:$0xff]
      %v532 = vld [vmem:[%s3 + $0x1e0] sm:$0xff]
      %v533 = vld [vmem:[%s3 + $0x1e8] sm:$0xff]
      %v534 = vld [vmem:[%s3 + $0x1f0] sm:$0xff]
      %v535 = vld [vmem:[%s3 + $0x1f8] sm:$0xff]
      %v536 = vld [vmem:[%s3 + $0x200] sm:$0xff]
      %v537 = vld [vmem:[%s3 + $0x208] sm:$0xff]
      %v538 = vld [vmem:[%s3 + $0x210] sm:$0xff]
      %v539 = vld [vmem:[%s3 + $0x218] sm:$0xff]
      %v540 = vld [vmem:[%s3 + $0x220] sm:$0xff]
      %v541 = vld [vmem:[%s3 + $0x228] sm:$0xff]
      %v542 = vld [vmem:[%s3 + $0x230] sm:$0xff]
      %v543 = vld [vmem:[%s3 + $0x238] sm:$0xff]
      %v544 = vld [vmem:[%s3 + $0x240] sm:$0xff]
      %v545 = vld [vmem:[%s3 + $0x248] sm:$0xff]
      %v546 = vld [vmem:[%s3 + $0x250] sm:$0xff]
      %v547 = vld [vmem:[%s3 + $0x258] sm:$0xff]
      %v548 = vld [vmem:[%s3 + $0x260] sm:$0xff]
      %v549 = vld [vmem:[%s3 + $0x268] sm:$0xff]
      %v550 = vld [vmem:[%s3 + $0x270] sm:$0xff]
      %v551 = vld [vmem:[%s3 + $0x278] sm:$0xff]
      %vm586 = vcmask 1046528
      %v587 = vrot.slane %v358, 1
      %v588 = vrot.slane %v360, 1
      %v589 = vsel %vm586, %v587, %v588
      %v590 = vrot.slane %v359, 1
      %v591 = vrot.slane %v361, 1
      %v592 = vsel %vm586, %v590, %v591
      %v593 = vrot.slane %v362, 1
      %v594 = vsel %vm586, %v588, %v593
      %v595 = vrot.slane %v363, 1
      %v596 = vsel %vm586, %v591, %v595
      %v597 = vrot.slane %v364, 1
      %v598 = vsel %vm586, %v593, %v597
      %v599 = vrot.slane %v365, 1
      %v600 = vsel %vm586, %v595, %v599
      %v601 = vrot.slane %v366, 1
      %v602 = vsel %vm586, %v597, %v601
      %v603 = vrot.slane %v367, 1
      %v604 = vsel %vm586, %v599, %v603
      %v605 = vrot.slane %v368, 1
      %v606 = vsel %vm586, %v601, %v605
      %v607 = vrot.slane %v369, 1
      %v608 = vsel %vm586, %v603, %v607
      %v609 = vrot.slane %v370, 1
      %v610 = vsel %vm586, %v605, %v609
      %v611 = vrot.slane %v371, 1
      %v612 = vsel %vm586, %v607, %v611
      %v613 = vrot.slane %v372, 1
      %v614 = vsel %vm586, %v609, %v613
      %v615 = vrot.slane %v373, 1
      %v616 = vsel %vm586, %v611, %v615
      %v617 = vrot.slane %v374, 1
      %v618 = vsel %vm586, %v613, %v617
      %v619 = vrot.slane %v375, 1
      %v620 = vsel %vm586, %v615, %v619
      %v621 = vrot.slane %v376, 1
      %v622 = vsel %vm586, %v617, %v621
      %v623 = vrot.slane %v377, 1
      %v624 = vsel %vm586, %v619, %v623
      %v625 = vrot.slane %v378, 1
      %v626 = vsel %vm586, %v621, %v625
      %v627 = vrot.slane %v379, 1
      %v628 = vsel %vm586, %v623, %v627
      %v629 = vrot.slane %v380, 1
      %v630 = vsel %vm586, %v625, %v629
      %v631 = vrot.slane %v381, 1
      %v632 = vsel %vm586, %v627, %v631
      %v633 = vrot.slane %v382, 1
      %v634 = vsel %vm586, %v629, %v633
      %v635 = vrot.slane %v383, 1
      %v636 = vsel %vm586, %v631, %v635
      %v637 = vrot.slane %v384, 1
      %v638 = vsel %vm586, %v633, %v637
      %v639 = vrot.slane %v385, 1
      %v640 = vsel %vm586, %v635, %v639
      %v641 = vrot.slane %v386, 1
      %v642 = vsel %vm586, %v637, %v641
      %v643 = vrot.slane %v387, 1
      %v644 = vsel %vm586, %v639, %v643
      %v645 = vrot.slane %v388, 1
      %v646 = vsel %vm586, %v641, %v645
      %v647 = vrot.slane %v389, 1
      %v648 = vsel %vm586, %v643, %v647
      %v649 = vrot.slane %v390, 1
      %v650 = vsel %vm586, %v645, %v649
      %v651 = vrot.slane %v391, 1
      %v652 = vsel %vm586, %v647, %v651
      %vm669 = vcmask 195584
      %v671 = vsel %vm669, %v473, 0
      %v674 = vsel %vm669, %v475, 0
      %v677 = vsel %vm669, %v477, 0
      %v680 = vsel %vm669, %v479, 0
      %v683 = vsel %vm669, %v481, 0
      %v686 = vsel %vm669, %v483, 0
      %v689 = vsel %vm669, %v485, 0
      %v692 = vsel %vm669, %v487, 0
      %v695 = vsel %vm669, %v489, 0
      %v698 = vsel %vm669, %v491, 0
      %v701 = vsel %vm669, %v493, 0
      %v704 = vsel %vm669, %v495, 0
      %v707 = vsel %vm669, %v497, 0
      %v710 = vsel %vm669, %v499, 0
      %v713 = vsel %vm669, %v501, 0
      %v716 = vsel %vm669, %v503, 0
      %v719 = vsel %vm669, %v505, 0
      %v722 = vsel %vm669, %v507, 0
      %v725 = vsel %vm669, %v509, 0
      %v728 = vsel %vm669, %v511, 0
      %v731 = vsel %vm669, %v513, 0
      %v734 = vsel %vm669, %v515, 0
      %v737 = vsel %vm669, %v517, 0
      %v740 = vsel %vm669, %v519, 0
      %v743 = vsel %vm669, %v521, 0
      %v746 = vsel %vm669, %v523, 0
      %v749 = vsel %vm669, %v525, 0
      %v752 = vsel %vm669, %v527, 0
      %v755 = vsel %vm669, %v529, 0
      %v758 = vsel %vm669, %v531, 0
      %v761 = vsel %vm669, %v533, 0
      %v764 = vsel %vm669, %v535, 0
      %v767 = vsel %vm669, %v537, 0
      %v770 = vsel %vm669, %v539, 0
      %v773 = vsel %vm669, %v541, 0
      %v776 = vsel %vm669, %v543, 0
      %v779 = vsel %vm669, %v545, 0
      %v782 = vsel %vm669, %v547, 0
      %v785 = vsel %vm669, %v549, 0
      %v788 = vsel %vm669, %v551, 0
      %v790 = vsel %vm669, %v592, 0
      %v792 = vsel %vm669, %v596, 0
      %v794 = vsel %vm669, %v600, 0
      %v796 = vsel %vm669, %v604, 0
      %v798 = vsel %vm669, %v608, 0
      %v800 = vsel %vm669, %v612, 0
      %v802 = vsel %vm669, %v616, 0
      %v804 = vsel %vm669, %v620, 0
      %v806 = vsel %vm669, %v624, 0
      %v808 = vsel %vm669, %v628, 0
      %v810 = vsel %vm669, %v632, 0
      %v812 = vsel %vm669, %v636, 0
      %v814 = vsel %vm669, %v640, 0
      %v816 = vsel %vm669, %v644, 0
      %v818 = vsel %vm669, %v648, 0
      %v820 = vsel %vm669, %v652, 0
      %822 = vmatprep.subr.mxu0 %v820
      %823 = vmatpush1.xpose.msra.mxu0 %v650
      %824 = vmatprep.subr.mxu0 %v818
      %825 = vmatpush1.xpose.msra.mxu0 %v646
      %826 = vmatprep.subr.mxu0 %v816
      %827 = vmatpush1.xpose.msra.mxu0 %v642
      %828 = vmatprep.subr.mxu0 %v814
      %829 = vmatpush1.xpose.msra.mxu0 %v638
      %830 = vmatprep.subr.mxu0 %v812
      %831 = vmatpush1.xpose.msra.mxu0 %v634
      %832 = vmatprep.subr.mxu0 %v810
      %833 = vmatpush1.xpose.msra.mxu0 %v630
      %834 = vmatprep.subr.mxu0 %v808
      %835 = vmatpush1.xpose.msra.mxu0 %v626
      %836 = vmatprep.subr.mxu0 %v806
      %837 = vmatpush1.xpose.msra.mxu0 %v622
      %838 = vmatprep.subr.mxu0 %v804
      %839 = vmatpush1.xpose.msra.mxu0 %v618
      %840 = vmatprep.subr.mxu0 %v802
      %841 = vmatpush1.xpose.msra.mxu0 %v614
      %842 = vmatprep.subr.mxu0 %v800
      %843 = vmatpush1.xpose.msra.mxu0 %v610
      %844 = vmatprep.subr.mxu0 %v798
      %845 = vmatpush1.xpose.msra.mxu0 %v606
      %846 = vmatprep.subr.mxu0 %v796
      %847 = vmatpush1.xpose.msra.mxu0 %v602
      %848 = vmatprep.subr.mxu0 %v794
      %849 = vmatpush1.xpose.msra.mxu0 %v598
      %850 = vmatprep.subr.mxu0 %v792
      %851 = vmatpush1.xpose.msra.mxu0 %v594
      %852 = vmatprep.subr.mxu0 %v790
      %853 = vmatpush1.xpose.msra.mxu0 %v589
      %854 = vmatprep.subr.mxu0 0.0
      %855 = vmatpush2.xpose.msra.mxu0 0.0
      %856 = vmatprep.subr.mxu0 0.0
      %857 = vmatpush2.xpose.msra.mxu0 0.0
      %858 = vmatprep.subr.mxu0 0.0
      %859 = vmatpush2.xpose.msra.mxu0 0.0
      %860 = vmatprep.subr.mxu0 0.0
      %861 = vmatpush2.xpose.msra.mxu0 0.0
      %862 = vmatprep.subr.mxu0 0.0
      %863 = vmatpush2.xpose.msra.mxu0 0.0
      %864 = vmatprep.subr.mxu0 0.0
      %865 = vmatpush2.xpose.msra.mxu0 0.0
      %866 = vmatprep.subr.mxu0 0.0
      %867 = vmatpush2.xpose.msra.mxu0 0.0
      %868 = vmatprep.subr.mxu0 0.0
      %869 = vmatpush2.xpose.msra.mxu0 0.0
      %870 = vmatprep.subr.mxu0 0.0
      %871 = vmatpush2.xpose.msra.mxu0 0.0
      %872 = vmatprep.subr.mxu0 0.0
      %873 = vmatpush2.xpose.msra.mxu0 0.0
      %874 = vmatprep.subr.mxu0 0.0
      %875 = vmatpush2.xpose.msra.mxu0 0.0
      %876 = vmatprep.subr.mxu0 0.0
      %877 = vmatpush2.xpose.msra.mxu0 0.0
      %878 = vmatprep.subr.mxu0 0.0
      %879 = vmatpush2.xpose.msra.mxu0 0.0
      %880 = vmatprep.subr.mxu0 0.0
      %881 = vmatpush2.xpose.msra.mxu0 0.0
      %882 = vmatprep.subr.mxu0 0.0
      %883 = vmatpush2.xpose.msra.mxu0 0.0
      %884 = vmatprep.subr.mxu0 0.0
      %885 = vmatpush2.xpose.msra.mxu0 0.0
      %886 = vmatprep.mubr.f32.mxu0 %v671
      %887 = vmatmul.mubr.f32.gmra.mxu0 %v472
      %v888 = vpop.f32.mrf.mxu0
      %v889 = vadd.f32 0.0, %v888
      %v890 = vpop.f32.mrf.mxu0
      %891 = vmatprep.mubr.f32.mxu0 %v674
      %892 = vmatmul.mubr.f32.gmra.mxu0 %v474
      %v893 = vpop.f32.mrf.mxu0
      %v894 = vadd.f32 0.0, %v893
      %v895 = vpop.f32.mrf.mxu0
      %896 = vmatprep.mubr.f32.mxu0 %v677
      %897 = vmatmul.mubr.f32.gmra.mxu0 %v476
      %v898 = vpop.f32.mrf.mxu0
      %v899 = vadd.f32 0.0, %v898
      %v900 = vpop.f32.mrf.mxu0
      %901 = vmatprep.mubr.f32.mxu0 %v680
      %902 = vmatmul.mubr.f32.gmra.mxu0 %v478
      %v903 = vpop.f32.mrf.mxu0
      %v904 = vadd.f32 0.0, %v903
      %v905 = vpop.f32.mrf.mxu0
      %906 = vmatprep.mubr.f32.mxu0 %v683
      %907 = vmatmul.mubr.f32.gmra.mxu0 %v480
      %v908 = vpop.f32.mrf.mxu0
      %v909 = vadd.f32 0.0, %v908
      %v910 = vpop.f32.mrf.mxu0
      %911 = vmatprep.mubr.f32.mxu0 %v686
      %912 = vmatmul.mubr.f32.gmra.mxu0 %v482
      %v913 = vpop.f32.mrf.mxu0
      %v914 = vadd.f32 0.0, %v913
      %v915 = vpop.f32.mrf.mxu0
      %916 = vmatprep.mubr.f32.mxu0 %v689
      %917 = vmatmul.mubr.f32.gmra.mxu0 %v484
      %v918 = vpop.f32.mrf.mxu0
      %v919 = vadd.f32 0.0, %v918
      %v920 = vpop.f32.mrf.mxu0
      %921 = vmatprep.mubr.f32.mxu0 %v692
      %922 = vmatmul.mubr.f32.gmra.mxu0 %v486
      %v923 = vpop.f32.mrf.mxu0
      %v924 = vadd.f32 0.0, %v923
      %v925 = vpop.f32.mrf.mxu0
      %926 = vmatprep.mubr.f32.mxu0 %v695
      %927 = vmatmul.mubr.f32.gmra.mxu0 %v488
      %v928 = vpop.f32.mrf.mxu0
      %v929 = vadd.f32 0.0, %v928
      %v930 = vpop.f32.mrf.mxu0
      %931 = vmatprep.mubr.f32.mxu0 %v698
      %932 = vmatmul.mubr.f32.gmra.mxu0 %v490
      %v933 = vpop.f32.mrf.mxu0
      %v934 = vadd.f32 0.0, %v933
      %v935 = vpop.f32.mrf.mxu0
      %936 = vmatprep.mubr.f32.mxu0 %v701
      %937 = vmatmul.mubr.f32.gmra.mxu0 %v492
      %v938 = vpop.f32.mrf.mxu0
      %v939 = vadd.f32 0.0, %v938
      %v940 = vpop.f32.mrf.mxu0
      %941 = vmatprep.mubr.f32.mxu0 %v704
      %942 = vmatmul.mubr.f32.gmra.mxu0 %v494
      %v943 = vpop.f32.mrf.mxu0
      %v944 = vadd.f32 0.0, %v943
      %v945 = vpop.f32.mrf.mxu0
      %946 = vmatprep.mubr.f32.mxu0 %v707
      %947 = vmatmul.mubr.f32.gmra.mxu0 %v496
      %v948 = vpop.f32.mrf.mxu0
      %v949 = vadd.f32 0.0, %v948
      %v950 = vpop.f32.mrf.mxu0
      %951 = vmatprep.mubr.f32.mxu0 %v710
      %952 = vmatmul.mubr.f32.gmra.mxu0 %v498
      %v953 = vpop.f32.mrf.mxu0
      %v954 = vadd.f32 0.0, %v953
      %v955 = vpop.f32.mrf.mxu0
      %956 = vmatprep.mubr.f32.mxu0 %v713
      %957 = vmatmul.mubr.f32.gmra.mxu0 %v500
      %v958 = vpop.f32.mrf.mxu0
      %v959 = vadd.f32 0.0, %v958
      %v960 = vpop.f32.mrf.mxu0
      %961 = vmatprep.mubr.f32.mxu0 %v716
      %962 = vmatmul.mubr.f32.gmra.mxu0 %v502
      %v963 = vpop.f32.mrf.mxu0
      %v964 = vadd.f32 0.0, %v963
      %v965 = vpop.f32.mrf.mxu0
      %966 = vmatprep.mubr.f32.mxu0 %v719
      %967 = vmatmul.mubr.f32.gmra.mxu0 %v504
      %v968 = vpop.f32.mrf.mxu0
      %v969 = vadd.f32 0.0, %v968
      %v970 = vpop.f32.mrf.mxu0
      %971 = vmatprep.mubr.f32.mxu0 %v722
      %972 = vmatmul.mubr.f32.gmra.mxu0 %v506
      %v973 = vpop.f32.mrf.mxu0
      %v974 = vadd.f32 0.0, %v973
      %v975 = vpop.f32.mrf.mxu0
      %976 = vmatprep.mubr.f32.mxu0 %v725
      %977 = vmatmul.mubr.f32.gmra.mxu0 %v508
      %v978 = vpop.f32.mrf.mxu0
      %v979 = vadd.f32 0.0, %v978
      %v980 = vpop.f32.mrf.mxu0
      %981 = vmatprep.mubr.f32.mxu0 %v728
      %982 = vmatmul.mubr.f32.gmra.mxu0 %v510
      %v983 = vpop.f32.mrf.mxu0
      %v984 = vadd.f32 0.0, %v983
      %v985 = vpop.f32.mrf.mxu0
      %986 = vmatprep.mubr.f32.mxu0 %v731
      %987 = vmatmul.mubr.f32.gmra.mxu0 %v512
      %v988 = vpop.f32.mrf.mxu0
      %v989 = vadd.f32 0.0, %v988
      %v990 = vpop.f32.mrf.mxu0
      %991 = vmatprep.mubr.f32.mxu0 %v734
      %992 = vmatmul.mubr.f32.gmra.mxu0 %v514
      %v993 = vpop.f32.mrf.mxu0
      %v994 = vadd.f32 0.0, %v993
      %v995 = vpop.f32.mrf.mxu0
      %996 = vmatprep.mubr.f32.mxu0 %v737
      %997 = vmatmul.mubr.f32.gmra.mxu0 %v516
      %v998 = vpop.f32.mrf.mxu0
      %v999 = vadd.f32 0.0, %v998
      %v1000 = vpop.f32.mrf.mxu0
      %1001 = vmatprep.mubr.f32.mxu0 %v740
      %1002 = vmatmul.mubr.f32.gmra.mxu0 %v518
      %v1003 = vpop.f32.mrf.mxu0
      %v1004 = vadd.f32 0.0, %v1003
      %v1005 = vpop.f32.mrf.mxu0
      %1006 = vmatprep.mubr.f32.mxu0 %v743
      %1007 = vmatmul.mubr.f32.gmra.mxu0 %v520
      %v1008 = vpop.f32.mrf.mxu0
      %v1009 = vadd.f32 0.0, %v1008
      %v1010 = vpop.f32.mrf.mxu0
      %1011 = vmatprep.mubr.f32.mxu0 %v746
      %1012 = vmatmul.mubr.f32.gmra.mxu0 %v522
      %v1013 = vpop.f32.mrf.mxu0
      %v1014 = vadd.f32 0.0, %v1013
      %v1015 = vpop.f32.mrf.mxu0
      %1016 = vmatprep.mubr.f32.mxu0 %v749
      %1017 = vmatmul.mubr.f32.gmra.mxu0 %v524
      %v1018 = vpop.f32.mrf.mxu0
      %v1019 = vadd.f32 0.0, %v1018
      %v1020 = vpop.f32.mrf.mxu0
      %1021 = vmatprep.mubr.f32.mxu0 %v752
      %1022 = vmatmul.mubr.f32.gmra.mxu0 %v526
      %v1023 = vpop.f32.mrf.mxu0
      %v1024 = vadd.f32 0.0, %v1023
      %v1025 = vpop.f32.mrf.mxu0
      %1026 = vmatprep.mubr.f32.mxu0 %v755
      %1027 = vmatmul.mubr.f32.gmra.mxu0 %v528
      %v1028 = vpop.f32.mrf.mxu0
      %v1029 = vadd.f32 0.0, %v1028
      %v1030 = vpop.f32.mrf.mxu0
      %1031 = vmatprep.mubr.f32.mxu0 %v758
      %1032 = vmatmul.mubr.f32.gmra.mxu0 %v530
      %v1033 = vpop.f32.mrf.mxu0
      %v1034 = vadd.f32 0.0, %v1033
      %v1035 = vpop.f32.mrf.mxu0
      %1036 = vmatprep.mubr.f32.mxu0 %v761
      %1037 = vmatmul.mubr.f32.gmra.mxu0 %v532
      %v1038 = vpop.f32.mrf.mxu0
      %v1039 = vadd.f32 0.0, %v1038
      %v1040 = vpop.f32.mrf.mxu0
      %1041 = vmatprep.mubr.f32.mxu0 %v764
      %1042 = vmatmul.mubr.f32.gmra.mxu0 %v534
      %v1043 = vpop.f32.mrf.mxu0
      %v1044 = vadd.f32 0.0, %v1043
      %v1045 = vpop.f32.mrf.mxu0
      %1046 = vmatprep.mubr.f32.mxu0 %v767
      %1047 = vmatmul.mubr.f32.gmra.mxu0 %v536
      %v1048 = vpop.f32.mrf.mxu0
      %v1049 = vadd.f32 0.0, %v1048
      %v1050 = vpop.f32.mrf.mxu0
      %1051 = vmatprep.mubr.f32.mxu0 %v770
      %1052 = vmatmul.mubr.f32.gmra.mxu0 %v538
      %v1053 = vpop.f32.mrf.mxu0
      %v1054 = vadd.f32 0.0, %v1053
      %v1055 = vpop.f32.mrf.mxu0
      %1056 = vmatprep.mubr.f32.mxu0 %v773
      %1057 = vmatmul.mubr.f32.gmra.mxu0 %v540
      %v1058 = vpop.f32.mrf.mxu0
      %v1059 = vadd.f32 0.0, %v1058
      %v1060 = vpop.f32.mrf.mxu0
      %1061 = vmatprep.mubr.f32.mxu0 %v776
      %1062 = vmatmul.mubr.f32.gmra.mxu0 %v542
      %v1063 = vpop.f32.mrf.mxu0
      %v1064 = vadd.f32 0.0, %v1063
      %v1065 = vpop.f32.mrf.mxu0
      %1066 = vmatprep.mubr.f32.mxu0 %v779
      %1067 = vmatmul.mubr.f32.gmra.mxu0 %v544
      %v1068 = vpop.f32.mrf.mxu0
      %v1069 = vadd.f32 0.0, %v1068
      %v1070 = vpop.f32.mrf.mxu0
      %1071 = vmatprep.mubr.f32.mxu0 %v782
      %1072 = vmatmul.mubr.f32.gmra.mxu0 %v546
      %v1073 = vpop.f32.mrf.mxu0
      %v1074 = vadd.f32 0.0, %v1073
      %v1075 = vpop.f32.mrf.mxu0
      %1076 = vmatprep.mubr.f32.mxu0 %v785
      %1077 = vmatmul.mubr.f32.gmra.mxu0 %v548
      %v1078 = vpop.f32.mrf.mxu0
      %v1079 = vadd.f32 0.0, %v1078
      %v1080 = vpop.f32.mrf.mxu0
      %1081 = vmatprep.mubr.f32.mxu0 %v788
      %1082 = vmatmul.mubr.f32.gmra.mxu0 %v550
      %v1083 = vpop.f32.mrf.mxu0
      %v1084 = vadd.f32 0.0, %v1083
      %v1085 = vpop.f32.mrf.mxu0
      %1086 = vdwg.mxu0
      %v1088 = vsel %vm669, %v393, 0
      %v1091 = vsel %vm669, %v395, 0
      %v1094 = vsel %vm669, %v397, 0
      %v1097 = vsel %vm669, %v399, 0
      %v1100 = vsel %vm669, %v401, 0
      %v1103 = vsel %vm669, %v403, 0
      %v1106 = vsel %vm669, %v405, 0
      %v1109 = vsel %vm669, %v407, 0
      %v1112 = vsel %vm669, %v409, 0
      %v1115 = vsel %vm669, %v411, 0
      %v1118 = vsel %vm669, %v413, 0
      %v1121 = vsel %vm669, %v415, 0
      %v1124 = vsel %vm669, %v417, 0
      %v1127 = vsel %vm669, %v419, 0
      %v1130 = vsel %vm669, %v421, 0
      %v1133 = vsel %vm669, %v423, 0
      %v1136 = vsel %vm669, %v425, 0
      %v1139 = vsel %vm669, %v427, 0
      %v1142 = vsel %vm669, %v429, 0
      %v1145 = vsel %vm669, %v431, 0
      %v1148 = vsel %vm669, %v433, 0
      %v1151 = vsel %vm669, %v435, 0
      %v1154 = vsel %vm669, %v437, 0
      %v1157 = vsel %vm669, %v439, 0
      %v1160 = vsel %vm669, %v441, 0
      %v1163 = vsel %vm669, %v443, 0
      %v1166 = vsel %vm669, %v445, 0
      %v1169 = vsel %vm669, %v447, 0
      %v1172 = vsel %vm669, %v449, 0
      %v1175 = vsel %vm669, %v451, 0
      %v1178 = vsel %vm669, %v453, 0
      %v1181 = vsel %vm669, %v455, 0
      %v1184 = vsel %vm669, %v457, 0
      %v1187 = vsel %vm669, %v459, 0
      %v1190 = vsel %vm669, %v461, 0
      %v1193 = vsel %vm669, %v463, 0
      %v1196 = vsel %vm669, %v465, 0
      %v1199 = vsel %vm669, %v467, 0
      %v1202 = vsel %vm669, %v469, 0
      %v1205 = vsel %vm669, %v471, 0
      %v1207 = vsel %vm669, %v359, 0
      %v1209 = vsel %vm669, %v361, 0
      %v1211 = vsel %vm669, %v363, 0
      %v1213 = vsel %vm669, %v365, 0
      %v1215 = vsel %vm669, %v367, 0
      %v1217 = vsel %vm669, %v369, 0
      %v1219 = vsel %vm669, %v371, 0
      %v1221 = vsel %vm669, %v373, 0
      %v1223 = vsel %vm669, %v375, 0
      %v1225 = vsel %vm669, %v377, 0
      %v1227 = vsel %vm669, %v379, 0
      %v1229 = vsel %vm669, %v381, 0
      %v1231 = vsel %vm669, %v383, 0
      %v1233 = vsel %vm669, %v385, 0
      %v1235 = vsel %vm669, %v387, 0
      %v1237 = vsel %vm669, %v389, 0
      %1239 = vmatprep.subr.mxu0 %v1237
      %1240 = vmatpush1.xpose.msra.mxu0 %v388
      %1241 = vmatprep.subr.mxu0 %v1235
      %1242 = vmatpush1.xpose.msra.mxu0 %v386
      %1243 = vmatprep.subr.mxu0 %v1233
      %1244 = vmatpush1.xpose.msra.mxu0 %v384
      %1245 = vmatprep.subr.mxu0 %v1231
      %1246 = vmatpush1.xpose.msra.mxu0 %v382
      %1247 = vmatprep.subr.mxu0 %v1229
      %1248 = vmatpush1.xpose.msra.mxu0 %v380
      %1249 = vmatprep.subr.mxu0 %v1227
      %1250 = vmatpush1.xpose.msra.mxu0 %v378
      %1251 = vmatprep.subr.mxu0 %v1225
      %1252 = vmatpush1.xpose.msra.mxu0 %v376
      %1253 = vmatprep.subr.mxu0 %v1223
      %1254 = vmatpush1.xpose.msra.mxu0 %v374
      %1255 = vmatprep.subr.mxu0 %v1221
      %1256 = vmatpush1.xpose.msra.mxu0 %v372
      %1257 = vmatprep.subr.mxu0 %v1219
      %1258 = vmatpush1.xpose.msra.mxu0 %v370
      %1259 = vmatprep.subr.mxu0 %v1217
      %1260 = vmatpush1.xpose.msra.mxu0 %v368
      %1261 = vmatprep.subr.mxu0 %v1215
      %1262 = vmatpush1.xpose.msra.mxu0 %v366
      %1263 = vmatprep.subr.mxu0 %v1213
      %1264 = vmatpush1.xpose.msra.mxu0 %v364
      %1265 = vmatprep.subr.mxu0 %v1211
      %1266 = vmatpush1.xpose.msra.mxu0 %v362
      %1267 = vmatprep.subr.mxu0 %v1209
      %1268 = vmatpush1.xpose.msra.mxu0 %v360
      %1269 = vmatprep.subr.mxu0 %v1207
      %1270 = vmatpush1.xpose.msra.mxu0 %v358
      %1271 = vmatprep.subr.mxu0 0.0
      %1272 = vmatpush2.xpose.msra.mxu0 0.0
      %1273 = vmatprep.subr.mxu0 0.0
      %1274 = vmatpush2.xpose.msra.mxu0 0.0
      %1275 = vmatprep.subr.mxu0 0.0
      %1276 = vmatpush2.xpose.msra.mxu0 0.0
      %1277 = vmatprep.subr.mxu0 0.0
      %1278 = vmatpush2.xpose.msra.mxu0 0.0
      %1279 = vmatprep.subr.mxu0 0.0
      %1280 = vmatpush2.xpose.msra.mxu0 0.0
      %1281 = vmatprep.subr.mxu0 0.0
      %1282 = vmatpush2.xpose.msra.mxu0 0.0
      %1283 = vmatprep.subr.mxu0 0.0
      %1284 = vmatpush2.xpose.msra.mxu0 0.0
      %1285 = vmatprep.subr.mxu0 0.0
      %1286 = vmatpush2.xpose.msra.mxu0 0.0
      %1287 = vmatprep.subr.mxu0 0.0
      %1288 = vmatpush2.xpose.msra.mxu0 0.0
      %1289 = vmatprep.subr.mxu0 0.0
      %1290 = vmatpush2.xpose.msra.mxu0 0.0
      %1291 = vmatprep.subr.mxu0 0.0
      %1292 = vmatpush2.xpose.msra.mxu0 0.0
      %1293 = vmatprep.subr.mxu0 0.0
      %1294 = vmatpush2.xpose.msra.mxu0 0.0
      %1295 = vmatprep.subr.mxu0 0.0
      %1296 = vmatpush2.xpose.msra.mxu0 0.0
      %1297 = vmatprep.subr.mxu0 0.0
      %1298 = vmatpush2.xpose.msra.mxu0 0.0
      %1299 = vmatprep.subr.mxu0 0.0
      %1300 = vmatpush2.xpose.msra.mxu0 0.0
      %1301 = vmatprep.subr.mxu0 0.0
      %1302 = vmatpush2.xpose.msra.mxu0 0.0
      %1303 = vmatprep.mubr.f32.mxu0 %v1088
      %1304 = vmatmul.mubr.f32.gmra.mxu0 %v392
      %v1305 = vpop.f32.mrf.mxu0
      %v1306 = vadd.f32 %v889, %v1305
      %v1307 = vpop.f32.mrf.mxu0
      %1308 = vmatprep.mubr.f32.mxu0 %v1091
      %1309 = vmatmul.mubr.f32.gmra.mxu0 %v394
      %v1310 = vpop.f32.mrf.mxu0
      %v1311 = vadd.f32 %v894, %v1310
      %v1312 = vpop.f32.mrf.mxu0
      %1313 = vmatprep.mubr.f32.mxu0 %v1094
      %1314 = vmatmul.mubr.f32.gmra.mxu0 %v396
      %v1315 = vpop.f32.mrf.mxu0
      %v1316 = vadd.f32 %v899, %v1315
      %v1317 = vpop.f32.mrf.mxu0
      %1318 = vmatprep.mubr.f32.mxu0 %v1097
      %1319 = vmatmul.mubr.f32.gmra.mxu0 %v398
      %v1320 = vpop.f32.mrf.mxu0
      %v1321 = vadd.f32 %v904, %v1320
      %v1322 = vpop.f32.mrf.mxu0
      %1323 = vmatprep.mubr.f32.mxu0 %v1100
      %1324 = vmatmul.mubr.f32.gmra.mxu0 %v400
      %v1325 = vpop.f32.mrf.mxu0
      %v1326 = vadd.f32 %v909, %v1325
      %v1327 = vpop.f32.mrf.mxu0
      %1328 = vmatprep.mubr.f32.mxu0 %v1103
      %1329 = vmatmul.mubr.f32.gmra.mxu0 %v402
      %v1330 = vpop.f32.mrf.mxu0
      %v1331 = vadd.f32 %v914, %v1330
      %v1332 = vpop.f32.mrf.mxu0
      %1333 = vmatprep.mubr.f32.mxu0 %v1106
      %1334 = vmatmul.mubr.f32.gmra.mxu0 %v404
      %v1335 = vpop.f32.mrf.mxu0
      %v1336 = vadd.f32 %v919, %v1335
      %v1337 = vpop.f32.mrf.mxu0
      %1338 = vmatprep.mubr.f32.mxu0 %v1109
      %1339 = vmatmul.mubr.f32.gmra.mxu0 %v406
      %v1340 = vpop.f32.mrf.mxu0
      %v1341 = vadd.f32 %v924, %v1340
      %v1342 = vpop.f32.mrf.mxu0
      %1343 = vmatprep.mubr.f32.mxu0 %v1112
      %1344 = vmatmul.mubr.f32.gmra.mxu0 %v408
      %v1345 = vpop.f32.mrf.mxu0
      %v1346 = vadd.f32 %v929, %v1345
      %v1347 = vpop.f32.mrf.mxu0
      %1348 = vmatprep.mubr.f32.mxu0 %v1115
      %1349 = vmatmul.mubr.f32.gmra.mxu0 %v410
      %v1350 = vpop.f32.mrf.mxu0
      %v1351 = vadd.f32 %v934, %v1350
      %v1352 = vpop.f32.mrf.mxu0
      %1353 = vmatprep.mubr.f32.mxu0 %v1118
      %1354 = vmatmul.mubr.f32.gmra.mxu0 %v412
      %v1355 = vpop.f32.mrf.mxu0
      %v1356 = vadd.f32 %v939, %v1355
      %v1357 = vpop.f32.mrf.mxu0
      %1358 = vmatprep.mubr.f32.mxu0 %v1121
      %1359 = vmatmul.mubr.f32.gmra.mxu0 %v414
      %v1360 = vpop.f32.mrf.mxu0
      %v1361 = vadd.f32 %v944, %v1360
      %v1362 = vpop.f32.mrf.mxu0
      %1363 = vmatprep.mubr.f32.mxu0 %v1124
      %1364 = vmatmul.mubr.f32.gmra.mxu0 %v416
      %v1365 = vpop.f32.mrf.mxu0
      %v1366 = vadd.f32 %v949, %v1365
      %v1367 = vpop.f32.mrf.mxu0
      %1368 = vmatprep.mubr.f32.mxu0 %v1127
      %1369 = vmatmul.mubr.f32.gmra.mxu0 %v418
      %v1370 = vpop.f32.mrf.mxu0
      %v1371 = vadd.f32 %v954, %v1370
      %v1372 = vpop.f32.mrf.mxu0
      %1373 = vmatprep.mubr.f32.mxu0 %v1130
      %1374 = vmatmul.mubr.f32.gmra.mxu0 %v420
      %v1375 = vpop.f32.mrf.mxu0
      %v1376 = vadd.f32 %v959, %v1375
      %v1377 = vpop.f32.mrf.mxu0
      %1378 = vmatprep.mubr.f32.mxu0 %v1133
      %1379 = vmatmul.mubr.f32.gmra.mxu0 %v422
      %v1380 = vpop.f32.mrf.mxu0
      %v1381 = vadd.f32 %v964, %v1380
      %v1382 = vpop.f32.mrf.mxu0
      %1383 = vmatprep.mubr.f32.mxu0 %v1136
      %1384 = vmatmul.mubr.f32.gmra.mxu0 %v424
      %v1385 = vpop.f32.mrf.mxu0
      %v1386 = vadd.f32 %v969, %v1385
      %v1387 = vpop.f32.mrf.mxu0
      %1388 = vmatprep.mubr.f32.mxu0 %v1139
      %1389 = vmatmul.mubr.f32.gmra.mxu0 %v426
      %v1390 = vpop.f32.mrf.mxu0
      %v1391 = vadd.f32 %v974, %v1390
      %v1392 = vpop.f32.mrf.mxu0
      %1393 = vmatprep.mubr.f32.mxu0 %v1142
      %1394 = vmatmul.mubr.f32.gmra.mxu0 %v428
      %v1395 = vpop.f32.mrf.mxu0
      %v1396 = vadd.f32 %v979, %v1395
      %v1397 = vpop.f32.mrf.mxu0
      %1398 = vmatprep.mubr.f32.mxu0 %v1145
      %1399 = vmatmul.mubr.f32.gmra.mxu0 %v430
      %v1400 = vpop.f32.mrf.mxu0
      %v1401 = vadd.f32 %v984, %v1400
      %v1402 = vpop.f32.mrf.mxu0
      %1403 = vmatprep.mubr.f32.mxu0 %v1148
      %1404 = vmatmul.mubr.f32.gmra.mxu0 %v432
      %v1405 = vpop.f32.mrf.mxu0
      %v1406 = vadd.f32 %v989, %v1405
      %v1407 = vpop.f32.mrf.mxu0
      %1408 = vmatprep.mubr.f32.mxu0 %v1151
      %1409 = vmatmul.mubr.f32.gmra.mxu0 %v434
      %v1410 = vpop.f32.mrf.mxu0
      %v1411 = vadd.f32 %v994, %v1410
      %v1412 = vpop.f32.mrf.mxu0
      %1413 = vmatprep.mubr.f32.mxu0 %v1154
      %1414 = vmatmul.mubr.f32.gmra.mxu0 %v436
      %v1415 = vpop.f32.mrf.mxu0
      %v1416 = vadd.f32 %v999, %v1415
      %v1417 = vpop.f32.mrf.mxu0
      %1418 = vmatprep.mubr.f32.mxu0 %v1157
      %1419 = vmatmul.mubr.f32.gmra.mxu0 %v438
      %v1420 = vpop.f32.mrf.mxu0
      %v1421 = vadd.f32 %v1004, %v1420
      %v1422 = vpop.f32.mrf.mxu0
      %1423 = vmatprep.mubr.f32.mxu0 %v1160
      %1424 = vmatmul.mubr.f32.gmra.mxu0 %v440
      %v1425 = vpop.f32.mrf.mxu0
      %v1426 = vadd.f32 %v1009, %v1425
      %v1427 = vpop.f32.mrf.mxu0
      %1428 = vmatprep.mubr.f32.mxu0 %v1163
      %1429 = vmatmul.mubr.f32.gmra.mxu0 %v442
      %v1430 = vpop.f32.mrf.mxu0
      %v1431 = vadd.f32 %v1014, %v1430
      %v1432 = vpop.f32.mrf.mxu0
      %1433 = vmatprep.mubr.f32.mxu0 %v1166
      %1434 = vmatmul.mubr.f32.gmra.mxu0 %v444
      %v1435 = vpop.f32.mrf.mxu0
      %v1436 = vadd.f32 %v1019, %v1435
      %v1437 = vpop.f32.mrf.mxu0
      %1438 = vmatprep.mubr.f32.mxu0 %v1169
      %1439 = vmatmul.mubr.f32.gmra.mxu0 %v446
      %v1440 = vpop.f32.mrf.mxu0
      %v1441 = vadd.f32 %v1024, %v1440
      %v1442 = vpop.f32.mrf.mxu0
      %1443 = vmatprep.mubr.f32.mxu0 %v1172
      %1444 = vmatmul.mubr.f32.gmra.mxu0 %v448
      %v1445 = vpop.f32.mrf.mxu0
      %v1446 = vadd.f32 %v1029, %v1445
      %v1447 = vpop.f32.mrf.mxu0
      %1448 = vmatprep.mubr.f32.mxu0 %v1175
      %1449 = vmatmul.mubr.f32.gmra.mxu0 %v450
      %v1450 = vpop.f32.mrf.mxu0
      %v1451 = vadd.f32 %v1034, %v1450
      %v1452 = vpop.f32.mrf.mxu0
      %1453 = vmatprep.mubr.f32.mxu0 %v1178
      %1454 = vmatmul.mubr.f32.gmra.mxu0 %v452
      %v1455 = vpop.f32.mrf.mxu0
      %v1456 = vadd.f32 %v1039, %v1455
      %v1457 = vpop.f32.mrf.mxu0
      %1458 = vmatprep.mubr.f32.mxu0 %v1181
      %1459 = vmatmul.mubr.f32.gmra.mxu0 %v454
      %v1460 = vpop.f32.mrf.mxu0
      %v1461 = vadd.f32 %v1044, %v1460
      %v1462 = vpop.f32.mrf.mxu0
      %1463 = vmatprep.mubr.f32.mxu0 %v1184
      %1464 = vmatmul.mubr.f32.gmra.mxu0 %v456
      %v1465 = vpop.f32.mrf.mxu0
      %v1466 = vadd.f32 %v1049, %v1465
      %v1467 = vpop.f32.mrf.mxu0
      %1468 = vmatprep.mubr.f32.mxu0 %v1187
      %1469 = vmatmul.mubr.f32.gmra.mxu0 %v458
      %v1470 = vpop.f32.mrf.mxu0
      %v1471 = vadd.f32 %v1054, %v1470
      %v1472 = vpop.f32.mrf.mxu0
      %1473 = vmatprep.mubr.f32.mxu0 %v1190
      %1474 = vmatmul.mubr.f32.gmra.mxu0 %v460
      %v1475 = vpop.f32.mrf.mxu0
      %v1476 = vadd.f32 %v1059, %v1475
      %v1477 = vpop.f32.mrf.mxu0
      %1478 = vmatprep.mubr.f32.mxu0 %v1193
      %1479 = vmatmul.mubr.f32.gmra.mxu0 %v462
      %v1480 = vpop.f32.mrf.mxu0
      %v1481 = vadd.f32 %v1064, %v1480
      %v1482 = vpop.f32.mrf.mxu0
      %1483 = vmatprep.mubr.f32.mxu0 %v1196
      %1484 = vmatmul.mubr.f32.gmra.mxu0 %v464
      %v1485 = vpop.f32.mrf.mxu0
      %v1486 = vadd.f32 %v1069, %v1485
      %v1487 = vpop.f32.mrf.mxu0
      %1488 = vmatprep.mubr.f32.mxu0 %v1199
      %1489 = vmatmul.mubr.f32.gmra.mxu0 %v466
      %v1490 = vpop.f32.mrf.mxu0
      %v1491 = vadd.f32 %v1074, %v1490
      %v1492 = vpop.f32.mrf.mxu0
      %1493 = vmatprep.mubr.f32.mxu0 %v1202
      %1494 = vmatmul.mubr.f32.gmra.mxu0 %v468
      %v1495 = vpop.f32.mrf.mxu0
      %v1496 = vadd.f32 %v1079, %v1495
      %v1497 = vpop.f32.mrf.mxu0
      %1498 = vmatprep.mubr.f32.mxu0 %v1205
      %1499 = vmatmul.mubr.f32.gmra.mxu0 %v470
      %v1500 = vpop.f32.mrf.mxu0
      %v1501 = vadd.f32 %v1084, %v1500
      %v1502 = vpop.f32.mrf.mxu0
      %1503 = vdwg.mxu0
      %v1504 = vmul.f32 %v1306, %v1306
      %v1505 = vmul.f32 %v1311, %v1311
      %v1506 = vmul.f32 %v1316, %v1316
      %v1507 = vmul.f32 %v1321, %v1321
      %v1508 = vmul.f32 %v1326, %v1326
      %v1509 = vmul.f32 %v1331, %v1331
      %v1510 = vmul.f32 %v1336, %v1336
      %v1511 = vmul.f32 %v1341, %v1341
      %v1512 = vmul.f32 %v1346, %v1346
      %v1513 = vmul.f32 %v1351, %v1351
      %v1514 = vmul.f32 %v1356, %v1356
      %v1515 = vmul.f32 %v1361, %v1361
      %v1516 = vmul.f32 %v1366, %v1366
      %v1517 = vmul.f32 %v1371, %v1371
      %v1518 = vmul.f32 %v1376, %v1376
      %v1519 = vmul.f32 %v1381, %v1381
      %v1520 = vmul.f32 %v1386, %v1386
      %v1521 = vmul.f32 %v1391, %v1391
      %v1522 = vmul.f32 %v1396, %v1396
      %v1523 = vmul.f32 %v1401, %v1401
      %v1524 = vmul.f32 %v1406, %v1406
      %v1525 = vmul.f32 %v1411, %v1411
      %v1526 = vmul.f32 %v1416, %v1416
      %v1527 = vmul.f32 %v1421, %v1421
      %v1528 = vmul.f32 %v1426, %v1426
      %v1529 = vmul.f32 %v1431, %v1431
      %v1530 = vmul.f32 %v1436, %v1436
      %v1531 = vmul.f32 %v1441, %v1441
      %v1532 = vmul.f32 %v1446, %v1446
      %v1533 = vmul.f32 %v1451, %v1451
      %v1534 = vmul.f32 %v1456, %v1456
      %v1535 = vmul.f32 %v1461, %v1461
      %v1536 = vmul.f32 %v1466, %v1466
      %v1537 = vmul.f32 %v1471, %v1471
      %v1538 = vmul.f32 %v1476, %v1476
      %v1539 = vmul.f32 %v1481, %v1481
      %v1540 = vmul.f32 %v1486, %v1486
      %v1541 = vmul.f32 %v1491, %v1491
      %v1542 = vmul.f32 %v1496, %v1496
      %v1543 = vmul.f32 %v1501, %v1501
      %v1544 = vadd.f32 %v1504, %v1524
      %v1545 = vadd.f32 %v1505, %v1525
      %v1546 = vadd.f32 %v1506, %v1526
      %v1547 = vadd.f32 %v1507, %v1527
      %v1548 = vadd.f32 %v1508, %v1528
      %v1549 = vadd.f32 %v1509, %v1529
      %v1550 = vadd.f32 %v1510, %v1530
      %v1551 = vadd.f32 %v1511, %v1531
      %v1552 = vadd.f32 %v1512, %v1532
      %v1553 = vadd.f32 %v1513, %v1533
      %v1554 = vadd.f32 %v1514, %v1534
      %v1555 = vadd.f32 %v1515, %v1535
      %v1556 = vadd.f32 %v1516, %v1536
      %v1557 = vadd.f32 %v1517, %v1537
      %v1558 = vadd.f32 %v1518, %v1538
      %v1559 = vadd.f32 %v1519, %v1539
      %v1560 = vadd.f32 %v1520, %v1540
      %v1561 = vadd.f32 %v1521, %v1541
      %v1562 = vadd.f32 %v1522, %v1542
      %v1563 = vadd.f32 %v1523, %v1543
      %v1564 = vrsqrt.pop %v1544
      %v1565 = vmul.f32 %v1544, %v1564
      %vm1566 = vcmp.eq.f32.partialorder %v1544, inf
      %v1567 = vsel %vm1566, %v1544, %v1565
      %vm1568 = vcmp.eq.f32.partialorder %v1544, 0.0
      %v1569 = vand.u32 %v1544, 2147483648
      %v1570 = vsel %vm1568, %v1569, %v1567
      %v1571 = vrsqrt.pop %v1545
      %v1572 = vmul.f32 %v1545, %v1571
      %vm1573 = vcmp.eq.f32.partialorder %v1545, inf
      %v1574 = vsel %vm1573, %v1545, %v1572
      %vm1575 = vcmp.eq.f32.partialorder %v1545, 0.0
      %v1576 = vand.u32 %v1545, 2147483648
      %v1577 = vsel %vm1575, %v1576, %v1574
      %v1578 = vrsqrt.pop %v1546
      %v1579 = vmul.f32 %v1546, %v1578
      %vm1580 = vcmp.eq.f32.partialorder %v1546, inf
      %v1581 = vsel %vm1580, %v1546, %v1579
      %vm1582 = vcmp.eq.f32.partialorder %v1546, 0.0
      %v1583 = vand.u32 %v1546, 2147483648
      %v1584 = vsel %vm1582, %v1583, %v1581
      %v1585 = vrsqrt.pop %v1547
      %v1586 = vmul.f32 %v1547, %v1585
      %vm1587 = vcmp.eq.f32.partialorder %v1547, inf
      %v1588 = vsel %vm1587, %v1547, %v1586
      %vm1589 = vcmp.eq.f32.partialorder %v1547, 0.0
      %v1590 = vand.u32 %v1547, 2147483648
      %v1591 = vsel %vm1589, %v1590, %v1588
      %v1592 = vrsqrt.pop %v1548
      %v1593 = vmul.f32 %v1548, %v1592
      %vm1594 = vcmp.eq.f32.partialorder %v1548, inf
      %v1595 = vsel %vm1594, %v1548, %v1593
      %vm1596 = vcmp.eq.f32.partialorder %v1548, 0.0
      %v1597 = vand.u32 %v1548, 2147483648
      %v1598 = vsel %vm1596, %v1597, %v1595
      %v1599 = vrsqrt.pop %v1549
      %v1600 = vmul.f32 %v1549, %v1599
      %vm1601 = vcmp.eq.f32.partialorder %v1549, inf
      %v1602 = vsel %vm1601, %v1549, %v1600
      %vm1603 = vcmp.eq.f32.partialorder %v1549, 0.0
      %v1604 = vand.u32 %v1549, 2147483648
      %v1605 = vsel %vm1603, %v1604, %v1602
      %v1606 = vrsqrt.pop %v1550
      %v1607 = vmul.f32 %v1550, %v1606
      %vm1608 = vcmp.eq.f32.partialorder %v1550, inf
      %v1609 = vsel %vm1608, %v1550, %v1607
      %vm1610 = vcmp.eq.f32.partialorder %v1550, 0.0
      %v1611 = vand.u32 %v1550, 2147483648
      %v1612 = vsel %vm1610, %v1611, %v1609
      %v1613 = vrsqrt.pop %v1551
      %v1614 = vmul.f32 %v1551, %v1613
      %vm1615 = vcmp.eq.f32.partialorder %v1551, inf
      %v1616 = vsel %vm1615, %v1551, %v1614
      %vm1617 = vcmp.eq.f32.partialorder %v1551, 0.0
      %v1618 = vand.u32 %v1551, 2147483648
      %v1619 = vsel %vm1617, %v1618, %v1616
      %v1620 = vrsqrt.pop %v1552
      %v1621 = vmul.f32 %v1552, %v1620
      %vm1622 = vcmp.eq.f32.partialorder %v1552, inf
      %v1623 = vsel %vm1622, %v1552, %v1621
      %vm1624 = vcmp.eq.f32.partialorder %v1552, 0.0
      %v1625 = vand.u32 %v1552, 2147483648
      %v1626 = vsel %vm1624, %v1625, %v1623
      %v1627 = vrsqrt.pop %v1553
      %v1628 = vmul.f32 %v1553, %v1627
      %vm1629 = vcmp.eq.f32.partialorder %v1553, inf
      %v1630 = vsel %vm1629, %v1553, %v1628
      %vm1631 = vcmp.eq.f32.partialorder %v1553, 0.0
      %v1632 = vand.u32 %v1553, 2147483648
      %v1633 = vsel %vm1631, %v1632, %v1630
      %v1634 = vrsqrt.pop %v1554
      %v1635 = vmul.f32 %v1554, %v1634
      %vm1636 = vcmp.eq.f32.partialorder %v1554, inf
      %v1637 = vsel %vm1636, %v1554, %v1635
      %vm1638 = vcmp.eq.f32.partialorder %v1554, 0.0
      %v1639 = vand.u32 %v1554, 2147483648
      %v1640 = vsel %vm1638, %v1639, %v1637
      %v1641 = vrsqrt.pop %v1555
      %v1642 = vmul.f32 %v1555, %v1641
      %vm1643 = vcmp.eq.f32.partialorder %v1555, inf
      %v1644 = vsel %vm1643, %v1555, %v1642
      %vm1645 = vcmp.eq.f32.partialorder %v1555, 0.0
      %v1646 = vand.u32 %v1555, 2147483648
      %v1647 = vsel %vm1645, %v1646, %v1644
      %v1648 = vrsqrt.pop %v1556
      %v1649 = vmul.f32 %v1556, %v1648
      %vm1650 = vcmp.eq.f32.partialorder %v1556, inf
      %v1651 = vsel %vm1650, %v1556, %v1649
      %vm1652 = vcmp.eq.f32.partialorder %v1556, 0.0
      %v1653 = vand.u32 %v1556, 2147483648
      %v1654 = vsel %vm1652, %v1653, %v1651
      %v1655 = vrsqrt.pop %v1557
      %v1656 = vmul.f32 %v1557, %v1655
      %vm1657 = vcmp.eq.f32.partialorder %v1557, inf
      %v1658 = vsel %vm1657, %v1557, %v1656
      %vm1659 = vcmp.eq.f32.partialorder %v1557, 0.0
      %v1660 = vand.u32 %v1557, 2147483648
      %v1661 = vsel %vm1659, %v1660, %v1658
      %v1662 = vrsqrt.pop %v1558
      %v1663 = vmul.f32 %v1558, %v1662
      %vm1664 = vcmp.eq.f32.partialorder %v1558, inf
      %v1665 = vsel %vm1664, %v1558, %v1663
      %vm1666 = vcmp.eq.f32.partialorder %v1558, 0.0
      %v1667 = vand.u32 %v1558, 2147483648
      %v1668 = vsel %vm1666, %v1667, %v1665
      %v1669 = vrsqrt.pop %v1559
      %v1670 = vmul.f32 %v1559, %v1669
      %vm1671 = vcmp.eq.f32.partialorder %v1559, inf
      %v1672 = vsel %vm1671, %v1559, %v1670
      %vm1673 = vcmp.eq.f32.partialorder %v1559, 0.0
      %v1674 = vand.u32 %v1559, 2147483648
      %v1675 = vsel %vm1673, %v1674, %v1672
      %v1676 = vrsqrt.pop %v1560
      %v1677 = vmul.f32 %v1560, %v1676
      %vm1678 = vcmp.eq.f32.partialorder %v1560, inf
      %v1679 = vsel %vm1678, %v1560, %v1677
      %vm1680 = vcmp.eq.f32.partialorder %v1560, 0.0
      %v1681 = vand.u32 %v1560, 2147483648
      %v1682 = vsel %vm1680, %v1681, %v1679
      %v1683 = vrsqrt.pop %v1561
      %v1684 = vmul.f32 %v1561, %v1683
      %vm1685 = vcmp.eq.f32.partialorder %v1561, inf
      %v1686 = vsel %vm1685, %v1561, %v1684
      %vm1687 = vcmp.eq.f32.partialorder %v1561, 0.0
      %v1688 = vand.u32 %v1561, 2147483648
      %v1689 = vsel %vm1687, %v1688, %v1686
      %v1690 = vrsqrt.pop %v1562
      %v1691 = vmul.f32 %v1562, %v1690
      %vm1692 = vcmp.eq.f32.partialorder %v1562, inf
      %v1693 = vsel %vm1692, %v1562, %v1691
      %vm1694 = vcmp.eq.f32.partialorder %v1562, 0.0
      %v1695 = vand.u32 %v1562, 2147483648
      %v1696 = vsel %vm1694, %v1695, %v1693
      %v1697 = vrsqrt.pop %v1563
      %v1698 = vmul.f32 %v1563, %v1697
      %vm1699 = vcmp.eq.f32.partialorder %v1563, inf
      %v1700 = vsel %vm1699, %v1563, %v1698
      %vm1701 = vcmp.eq.f32.partialorder %v1563, 0.0
      %v1702 = vand.u32 %v1563, 2147483648
      %v1703 = vsel %vm1701, %v1702, %v1700
      %1704 = vst [vmem:[%s349] sm:$0xff] %v1570
      %1705 = vst [vmem:[%s349 + $0x8] sm:$0xff] %v1577
      %1706 = vst [vmem:[%s349 + $0x10] sm:$0xff] %v1584
      %1707 = vst [vmem:[%s349 + $0x18] sm:$0xff] %v1591
      %1708 = vst [vmem:[%s349 + $0x20] sm:$0xff] %v1598
      %1709 = vst [vmem:[%s349 + $0x28] sm:$0xff] %v1605
      %1710 = vst [vmem:[%s349 + $0x30] sm:$0xff] %v1612
      %1711 = vst [vmem:[%s349 + $0x38] sm:$0xff] %v1619
      %1712 = vst [vmem:[%s349 + $0x40] sm:$0xff] %v1626
      %1713 = vst [vmem:[%s349 + $0x48] sm:$0xff] %v1633
      %1714 = vst [vmem:[%s349 + $0x50] sm:$0xff] %v1640
      %1715 = vst [vmem:[%s349 + $0x58] sm:$0xff] %v1647
      %1716 = vst [vmem:[%s349 + $0x60] sm:$0xff] %v1654
      %1717 = vst [vmem:[%s349 + $0x68] sm:$0xff] %v1661
      %1718 = vst [vmem:[%s349 + $0x70] sm:$0xff] %v1668
      %1719 = vst [vmem:[%s349 + $0x78] sm:$0xff] %v1675
      %1720 = vst [vmem:[%s349 + $0x80] sm:$0xff] %v1682
      %1721 = vst [vmem:[%s349 + $0x88] sm:$0xff] %v1689
      %1722 = vst [vmem:[%s349 + $0x90] sm:$0xff] %v1696
      %1723 = vst [vmem:[%s349 + $0x98] sm:$0x1] %v1703
      %v1724 = vand.u32 2147483647, %v1306
      %v1725 = vand.u32 2147483647, %v1406
      %v1726 = vmin.f32 %v1724, %v1725
      %v1727 = vmax.f32 %v1724, %v1725
      %v1728 = vrcp.pop %v1727
      %v1729 = vmul.f32 %v1726, %v1728
      %v1730 = vmul.f32 %v1729, %v1729
      %v1731 = vmul.f32 0.002785687, %v1730
      %v1732 = vadd.f32 %v1731, -0.015866
      %v1733 = vmul.f32 %v1732, %v1730
      %v1734 = vadd.f32 %v1733, 0.04247222
      %v1735 = vmul.f32 %v1734, %v1730
      %v1736 = vadd.f32 %v1735, -0.074975304
      %v1737 = vmul.f32 %v1736, %v1730
      %v1738 = vadd.f32 %v1737, 0.1064488
      %v1739 = vmul.f32 %v1738, %v1730
      %v1740 = vadd.f32 %v1739, -0.14207031
      %v1741 = vmul.f32 %v1740, %v1730
      %v1742 = vadd.f32 %v1741, 0.19993454
      %v1743 = vmul.f32 %v1742, %v1730
      %v1744 = vadd.f32 %v1743, -0.33333147
      %v1745 = vmul.f32 %v1744, %v1730
      %v1746 = vmul.f32 %v1745, %v1729
      %v1747 = vadd.f32 %v1746, %v1729
      %vm1748 = vcmp.gt.f32.partialorder %v1725, %v1724
      %v1749 = vsub.f32 1.5707964, %v1747
      %v1750 = vsel %vm1748, %v1749, %v1747
      %vm1751 = vcmp.lt.f32.partialorder %v1306, 0.0
      %v1752 = vsub.f32 3.1415927, %v1750
      %v1753 = vsel %vm1751, %v1752, %v1750
      %vm1754 = vcmp.lt.s32.totalorder %v1306, 0
      %v1755 = vsel %vm1754, 3.1415927, 0.0
      %vm1756 = vcmp.eq.f32.partialorder %v1406, 0.0
      %v1757 = vsel %vm1756, %v1755, %v1753
      %vm1758 = vcmp.ne.f32.partialorder %v1306, %v1306
      %vm1759 = vcmp.ne.f32.partialorder %v1406, %v1406
      %vm1760 = vmor %vm1758, %vm1759
      %v1761 = vsel %vm1760, nan, %v1757
      %vm1762 = vcmp.lt.f32.partialorder %v1306, 0.0
      %v1763 = vsel %vm1762, 2.3561945, 0.7853982
      %vm1764 = vcmp.eq.s32.totalorder %v1724, inf
      %vm1765 = vcmp.eq.s32.totalorder %v1725, inf
      %vm1766 = vmand %vm1764, %vm1765
      %v1767 = vsel %vm1766, %v1763, %v1761
      %v1768 = vand.u32 2147483647, %v1767
      %v1769 = vand.u32 %v1406, 2147483648
      %v1770 = vor.u32 %v1768, %v1769
      %v1771 = vand.u32 2147483647, %v1311
      %v1772 = vand.u32 2147483647, %v1411
      %v1773 = vmin.f32 %v1771, %v1772
      %v1774 = vmax.f32 %v1771, %v1772
      %v1775 = vrcp.pop %v1774
      %v1776 = vmul.f32 %v1773, %v1775
      %v1777 = vmul.f32 %v1776, %v1776
      %v1778 = vmul.f32 0.002785687, %v1777
      %v1779 = vadd.f32 %v1778, -0.015866
      %v1780 = vmul.f32 %v1779, %v1777
      %v1781 = vadd.f32 %v1780, 0.04247222
      %v1782 = vmul.f32 %v1781, %v1777
      %v1783 = vadd.f32 %v1782, -0.074975304
      %v1784 = vmul.f32 %v1783, %v1777
      %v1785 = vadd.f32 %v1784, 0.1064488
      %v1786 = vmul.f32 %v1785, %v1777
      %v1787 = vadd.f32 %v1786, -0.14207031
      %v1788 = vmul.f32 %v1787, %v1777
      %v1789 = vadd.f32 %v1788, 0.19993454
      %v1790 = vmul.f32 %v1789, %v1777
      %v1791 = vadd.f32 %v1790, -0.33333147
      %v1792 = vmul.f32 %v1791, %v1777
      %v1793 = vmul.f32 %v1792, %v1776
      %v1794 = vadd.f32 %v1793, %v1776
      %vm1795 = vcmp.gt.f32.partialorder %v1772, %v1771
      %v1796 = vsub.f32 1.5707964, %v1794
      %v1797 = vsel %vm1795, %v1796, %v1794
      %vm1798 = vcmp.lt.f32.partialorder %v1311, 0.0
      %v1799 = vsub.f32 3.1415927, %v1797
      %v1800 = vsel %vm1798, %v1799, %v1797
      %vm1801 = vcmp.lt.s32.totalorder %v1311, 0
      %v1802 = vsel %vm1801, 3.1415927, 0.0
      %vm1803 = vcmp.eq.f32.partialorder %v1411, 0.0
      %v1804 = vsel %vm1803, %v1802, %v1800
      %vm1805 = vcmp.ne.f32.partialorder %v1311, %v1311
      %vm1806 = vcmp.ne.f32.partialorder %v1411, %v1411
      %vm1807 = vmor %vm1805, %vm1806
      %v1808 = vsel %vm1807, nan, %v1804
      %vm1809 = vcmp.lt.f32.partialorder %v1311, 0.0
      %v1810 = vsel %vm1809, 2.3561945, 0.7853982
      %vm1811 = vcmp.eq.s32.totalorder %v1771, inf
      %vm1812 = vcmp.eq.s32.totalorder %v1772, inf
      %vm1813 = vmand %vm1811, %vm1812
      %v1814 = vsel %vm1813, %v1810, %v1808
      %v1815 = vand.u32 2147483647, %v1814
      %v1816 = vand.u32 %v1411, 2147483648
      %v1817 = vor.u32 %v1815, %v1816
      %v1818 = vand.u32 2147483647, %v1316
      %v1819 = vand.u32 2147483647, %v1416
      %v1820 = vmin.f32 %v1818, %v1819
      %v1821 = vmax.f32 %v1818, %v1819
      %v1822 = vrcp.pop %v1821
      %v1823 = vmul.f32 %v1820, %v1822
      %v1824 = vmul.f32 %v1823, %v1823
      %v1825 = vmul.f32 0.002785687, %v1824
      %v1826 = vadd.f32 %v1825, -0.015866
      %v1827 = vmul.f32 %v1826, %v1824
      %v1828 = vadd.f32 %v1827, 0.04247222
      %v1829 = vmul.f32 %v1828, %v1824
      %v1830 = vadd.f32 %v1829, -0.074975304
      %v1831 = vmul.f32 %v1830, %v1824
      %v1832 = vadd.f32 %v1831, 0.1064488
      %v1833 = vmul.f32 %v1832, %v1824
      %v1834 = vadd.f32 %v1833, -0.14207031
      %v1835 = vmul.f32 %v1834, %v1824
      %v1836 = vadd.f32 %v1835, 0.19993454
      %v1837 = vmul.f32 %v1836, %v1824
      %v1838 = vadd.f32 %v1837, -0.33333147
      %v1839 = vmul.f32 %v1838, %v1824
      %v1840 = vmul.f32 %v1839, %v1823
      %v1841 = vadd.f32 %v1840, %v1823
      %vm1842 = vcmp.gt.f32.partialorder %v1819, %v1818
      %v1843 = vsub.f32 1.5707964, %v1841
      %v1844 = vsel %vm1842, %v1843, %v1841
      %vm1845 = vcmp.lt.f32.partialorder %v1316, 0.0
      %v1846 = vsub.f32 3.1415927, %v1844
      %v1847 = vsel %vm1845, %v1846, %v1844
      %vm1848 = vcmp.lt.s32.totalorder %v1316, 0
      %v1849 = vsel %vm1848, 3.1415927, 0.0
      %vm1850 = vcmp.eq.f32.partialorder %v1416, 0.0
      %v1851 = vsel %vm1850, %v1849, %v1847
      %vm1852 = vcmp.ne.f32.partialorder %v1316, %v1316
      %vm1853 = vcmp.ne.f32.partialorder %v1416, %v1416
      %vm1854 = vmor %vm1852, %vm1853
      %v1855 = vsel %vm1854, nan, %v1851
      %vm1856 = vcmp.lt.f32.partialorder %v1316, 0.0
      %v1857 = vsel %vm1856, 2.3561945, 0.7853982
      %vm1858 = vcmp.eq.s32.totalorder %v1818, inf
      %vm1859 = vcmp.eq.s32.totalorder %v1819, inf
      %vm1860 = vmand %vm1858, %vm1859
      %v1861 = vsel %vm1860, %v1857, %v1855
      %v1862 = vand.u32 2147483647, %v1861
      %v1863 = vand.u32 %v1416, 2147483648
      %v1864 = vor.u32 %v1862, %v1863
      %v1865 = vand.u32 2147483647, %v1321
      %v1866 = vand.u32 2147483647, %v1421
      %v1867 = vmin.f32 %v1865, %v1866
      %v1868 = vmax.f32 %v1865, %v1866
      %v1869 = vrcp.pop %v1868
      %v1870 = vmul.f32 %v1867, %v1869
      %v1871 = vmul.f32 %v1870, %v1870
      %v1872 = vmul.f32 0.002785687, %v1871
      %v1873 = vadd.f32 %v1872, -0.015866
      %v1874 = vmul.f32 %v1873, %v1871
      %v1875 = vadd.f32 %v1874, 0.04247222
      %v1876 = vmul.f32 %v1875, %v1871
      %v1877 = vadd.f32 %v1876, -0.074975304
      %v1878 = vmul.f32 %v1877, %v1871
      %v1879 = vadd.f32 %v1878, 0.1064488
      %v1880 = vmul.f32 %v1879, %v1871
      %v1881 = vadd.f32 %v1880, -0.14207031
      %v1882 = vmul.f32 %v1881, %v1871
      %v1883 = vadd.f32 %v1882, 0.19993454
      %v1884 = vmul.f32 %v1883, %v1871
      %v1885 = vadd.f32 %v1884, -0.33333147
      %v1886 = vmul.f32 %v1885, %v1871
      %v1887 = vmul.f32 %v1886, %v1870
      %v1888 = vadd.f32 %v1887, %v1870
      %vm1889 = vcmp.gt.f32.partialorder %v1866, %v1865
      %v1890 = vsub.f32 1.5707964, %v1888
      %v1891 = vsel %vm1889, %v1890, %v1888
      %vm1892 = vcmp.lt.f32.partialorder %v1321, 0.0
      %v1893 = vsub.f32 3.1415927, %v1891
      %v1894 = vsel %vm1892, %v1893, %v1891
      %vm1895 = vcmp.lt.s32.totalorder %v1321, 0
      %v1896 = vsel %vm1895, 3.1415927, 0.0
      %vm1897 = vcmp.eq.f32.partialorder %v1421, 0.0
      %v1898 = vsel %vm1897, %v1896, %v1894
      %vm1899 = vcmp.ne.f32.partialorder %v1321, %v1321
      %vm1900 = vcmp.ne.f32.partialorder %v1421, %v1421
      %vm1901 = vmor %vm1899, %vm1900
      %v1902 = vsel %vm1901, nan, %v1898
      %vm1903 = vcmp.lt.f32.partialorder %v1321, 0.0
      %v1904 = vsel %vm1903, 2.3561945, 0.7853982
      %vm1905 = vcmp.eq.s32.totalorder %v1865, inf
      %vm1906 = vcmp.eq.s32.totalorder %v1866, inf
      %vm1907 = vmand %vm1905, %vm1906
      %v1908 = vsel %vm1907, %v1904, %v1902
      %v1909 = vand.u32 2147483647, %v1908
      %v1910 = vand.u32 %v1421, 2147483648
      %v1911 = vor.u32 %v1909, %v1910
      %v1912 = vand.u32 2147483647, %v1326
      %v1913 = vand.u32 2147483647, %v1426
      %v1914 = vmin.f32 %v1912, %v1913
      %v1915 = vmax.f32 %v1912, %v1913
      %v1916 = vrcp.pop %v1915
      %v1917 = vmul.f32 %v1914, %v1916
      %v1918 = vmul.f32 %v1917, %v1917
      %v1919 = vmul.f32 0.002785687, %v1918
      %v1920 = vadd.f32 %v1919, -0.015866
      %v1921 = vmul.f32 %v1920, %v1918
      %v1922 = vadd.f32 %v1921, 0.04247222
      %v1923 = vmul.f32 %v1922, %v1918
      %v1924 = vadd.f32 %v1923, -0.074975304
      %v1925 = vmul.f32 %v1924, %v1918
      %v1926 = vadd.f32 %v1925, 0.1064488
      %v1927 = vmul.f32 %v1926, %v1918
      %v1928 = vadd.f32 %v1927, -0.14207031
      %v1929 = vmul.f32 %v1928, %v1918
      %v1930 = vadd.f32 %v1929, 0.19993454
      %v1931 = vmul.f32 %v1930, %v1918
      %v1932 = vadd.f32 %v1931, -0.33333147
      %v1933 = vmul.f32 %v1932, %v1918
      %v1934 = vmul.f32 %v1933, %v1917
      %v1935 = vadd.f32 %v1934, %v1917
      %vm1936 = vcmp.gt.f32.partialorder %v1913, %v1912
      %v1937 = vsub.f32 1.5707964, %v1935
      %v1938 = vsel %vm1936, %v1937, %v1935
      %vm1939 = vcmp.lt.f32.partialorder %v1326, 0.0
      %v1940 = vsub.f32 3.1415927, %v1938
      %v1941 = vsel %vm1939, %v1940, %v1938
      %vm1942 = vcmp.lt.s32.totalorder %v1326, 0
      %v1943 = vsel %vm1942, 3.1415927, 0.0
      %vm1944 = vcmp.eq.f32.partialorder %v1426, 0.0
      %v1945 = vsel %vm1944, %v1943, %v1941
      %vm1946 = vcmp.ne.f32.partialorder %v1326, %v1326
      %vm1947 = vcmp.ne.f32.partialorder %v1426, %v1426
      %vm1948 = vmor %vm1946, %vm1947
      %v1949 = vsel %vm1948, nan, %v1945
      %vm1950 = vcmp.lt.f32.partialorder %v1326, 0.0
      %v1951 = vsel %vm1950, 2.3561945, 0.7853982
      %vm1952 = vcmp.eq.s32.totalorder %v1912, inf
      %vm1953 = vcmp.eq.s32.totalorder %v1913, inf
      %vm1954 = vmand %vm1952, %vm1953
      %v1955 = vsel %vm1954, %v1951, %v1949
      %v1956 = vand.u32 2147483647, %v1955
      %v1957 = vand.u32 %v1426, 2147483648
      %v1958 = vor.u32 %v1956, %v1957
      %v1959 = vand.u32 2147483647, %v1331
      %v1960 = vand.u32 2147483647, %v1431
      %v1961 = vmin.f32 %v1959, %v1960
      %v1962 = vmax.f32 %v1959, %v1960
      %v1963 = vrcp.pop %v1962
      %v1964 = vmul.f32 %v1961, %v1963
      %v1965 = vmul.f32 %v1964, %v1964
      %v1966 = vmul.f32 0.002785687, %v1965
      %v1967 = vadd.f32 %v1966, -0.015866
      %v1968 = vmul.f32 %v1967, %v1965
      %v1969 = vadd.f32 %v1968, 0.04247222
      %v1970 = vmul.f32 %v1969, %v1965
      %v1971 = vadd.f32 %v1970, -0.074975304
      %v1972 = vmul.f32 %v1971, %v1965
      %v1973 = vadd.f32 %v1972, 0.1064488
      %v1974 = vmul.f32 %v1973, %v1965
      %v1975 = vadd.f32 %v1974, -0.14207031
      %v1976 = vmul.f32 %v1975, %v1965
      %v1977 = vadd.f32 %v1976, 0.19993454
      %v1978 = vmul.f32 %v1977, %v1965
      %v1979 = vadd.f32 %v1978, -0.33333147
      %v1980 = vmul.f32 %v1979, %v1965
      %v1981 = vmul.f32 %v1980, %v1964
      %v1982 = vadd.f32 %v1981, %v1964
      %vm1983 = vcmp.gt.f32.partialorder %v1960, %v1959
      %v1984 = vsub.f32 1.5707964, %v1982
      %v1985 = vsel %vm1983, %v1984, %v1982
      %vm1986 = vcmp.lt.f32.partialorder %v1331, 0.0
      %v1987 = vsub.f32 3.1415927, %v1985
      %v1988 = vsel %vm1986, %v1987, %v1985
      %vm1989 = vcmp.lt.s32.totalorder %v1331, 0
      %v1990 = vsel %vm1989, 3.1415927, 0.0
      %vm1991 = vcmp.eq.f32.partialorder %v1431, 0.0
      %v1992 = vsel %vm1991, %v1990, %v1988
      %vm1993 = vcmp.ne.f32.partialorder %v1331, %v1331
      %vm1994 = vcmp.ne.f32.partialorder %v1431, %v1431
      %vm1995 = vmor %vm1993, %vm1994
      %v1996 = vsel %vm1995, nan, %v1992
      %vm1997 = vcmp.lt.f32.partialorder %v1331, 0.0
      %v1998 = vsel %vm1997, 2.3561945, 0.7853982
      %vm1999 = vcmp.eq.s32.totalorder %v1959, inf
      %vm2000 = vcmp.eq.s32.totalorder %v1960, inf
      %vm2001 = vmand %vm1999, %vm2000
      %v2002 = vsel %vm2001, %v1998, %v1996
      %v2003 = vand.u32 2147483647, %v2002
      %v2004 = vand.u32 %v1431, 2147483648
      %v2005 = vor.u32 %v2003, %v2004
      %v2006 = vand.u32 2147483647, %v1336
      %v2007 = vand.u32 2147483647, %v1436
      %v2008 = vmin.f32 %v2006, %v2007
      %v2009 = vmax.f32 %v2006, %v2007
      %v2010 = vrcp.pop %v2009
      %v2011 = vmul.f32 %v2008, %v2010
      %v2012 = vmul.f32 %v2011, %v2011
      %v2013 = vmul.f32 0.002785687, %v2012
      %v2014 = vadd.f32 %v2013, -0.015866
      %v2015 = vmul.f32 %v2014, %v2012
      %v2016 = vadd.f32 %v2015, 0.04247222
      %v2017 = vmul.f32 %v2016, %v2012
      %v2018 = vadd.f32 %v2017, -0.074975304
      %v2019 = vmul.f32 %v2018, %v2012
      %v2020 = vadd.f32 %v2019, 0.1064488
      %v2021 = vmul.f32 %v2020, %v2012
      %v2022 = vadd.f32 %v2021, -0.14207031
      %v2023 = vmul.f32 %v2022, %v2012
      %v2024 = vadd.f32 %v2023, 0.19993454
      %v2025 = vmul.f32 %v2024, %v2012
      %v2026 = vadd.f32 %v2025, -0.33333147
      %v2027 = vmul.f32 %v2026, %v2012
      %v2028 = vmul.f32 %v2027, %v2011
      %v2029 = vadd.f32 %v2028, %v2011
      %vm2030 = vcmp.gt.f32.partialorder %v2007, %v2006
      %v2031 = vsub.f32 1.5707964, %v2029
      %v2032 = vsel %vm2030, %v2031, %v2029
      %vm2033 = vcmp.lt.f32.partialorder %v1336, 0.0
      %v2034 = vsub.f32 3.1415927, %v2032
      %v2035 = vsel %vm2033, %v2034, %v2032
      %vm2036 = vcmp.lt.s32.totalorder %v1336, 0
      %v2037 = vsel %vm2036, 3.1415927, 0.0
      %vm2038 = vcmp.eq.f32.partialorder %v1436, 0.0
      %v2039 = vsel %vm2038, %v2037, %v2035
      %vm2040 = vcmp.ne.f32.partialorder %v1336, %v1336
      %vm2041 = vcmp.ne.f32.partialorder %v1436, %v1436
      %vm2042 = vmor %vm2040, %vm2041
      %v2043 = vsel %vm2042, nan, %v2039
      %vm2044 = vcmp.lt.f32.partialorder %v1336, 0.0
      %v2045 = vsel %vm2044, 2.3561945, 0.7853982
      %vm2046 = vcmp.eq.s32.totalorder %v2006, inf
      %vm2047 = vcmp.eq.s32.totalorder %v2007, inf
      %vm2048 = vmand %vm2046, %vm2047
      %v2049 = vsel %vm2048, %v2045, %v2043
      %v2050 = vand.u32 2147483647, %v2049
      %v2051 = vand.u32 %v1436, 2147483648
      %v2052 = vor.u32 %v2050, %v2051
      %v2053 = vand.u32 2147483647, %v1341
      %v2054 = vand.u32 2147483647, %v1441
      %v2055 = vmin.f32 %v2053, %v2054
      %v2056 = vmax.f32 %v2053, %v2054
      %v2057 = vrcp.pop %v2056
      %v2058 = vmul.f32 %v2055, %v2057
      %v2059 = vmul.f32 %v2058, %v2058
      %v2060 = vmul.f32 0.002785687, %v2059
      %v2061 = vadd.f32 %v2060, -0.015866
      %v2062 = vmul.f32 %v2061, %v2059
      %v2063 = vadd.f32 %v2062, 0.04247222
      %v2064 = vmul.f32 %v2063, %v2059
      %v2065 = vadd.f32 %v2064, -0.074975304
      %v2066 = vmul.f32 %v2065, %v2059
      %v2067 = vadd.f32 %v2066, 0.1064488
      %v2068 = vmul.f32 %v2067, %v2059
      %v2069 = vadd.f32 %v2068, -0.14207031
      %v2070 = vmul.f32 %v2069, %v2059
      %v2071 = vadd.f32 %v2070, 0.19993454
      %v2072 = vmul.f32 %v2071, %v2059
      %v2073 = vadd.f32 %v2072, -0.33333147
      %v2074 = vmul.f32 %v2073, %v2059
      %v2075 = vmul.f32 %v2074, %v2058
      %v2076 = vadd.f32 %v2075, %v2058
      %vm2077 = vcmp.gt.f32.partialorder %v2054, %v2053
      %v2078 = vsub.f32 1.5707964, %v2076
      %v2079 = vsel %vm2077, %v2078, %v2076
      %vm2080 = vcmp.lt.f32.partialorder %v1341, 0.0
      %v2081 = vsub.f32 3.1415927, %v2079
      %v2082 = vsel %vm2080, %v2081, %v2079
      %vm2083 = vcmp.lt.s32.totalorder %v1341, 0
      %v2084 = vsel %vm2083, 3.1415927, 0.0
      %vm2085 = vcmp.eq.f32.partialorder %v1441, 0.0
      %v2086 = vsel %vm2085, %v2084, %v2082
      %vm2087 = vcmp.ne.f32.partialorder %v1341, %v1341
      %vm2088 = vcmp.ne.f32.partialorder %v1441, %v1441
      %vm2089 = vmor %vm2087, %vm2088
      %v2090 = vsel %vm2089, nan, %v2086
      %vm2091 = vcmp.lt.f32.partialorder %v1341, 0.0
      %v2092 = vsel %vm2091, 2.3561945, 0.7853982
      %vm2093 = vcmp.eq.s32.totalorder %v2053, inf
      %vm2094 = vcmp.eq.s32.totalorder %v2054, inf
      %vm2095 = vmand %vm2093, %vm2094
      %v2096 = vsel %vm2095, %v2092, %v2090
      %v2097 = vand.u32 2147483647, %v2096
      %v2098 = vand.u32 %v1441, 2147483648
      %v2099 = vor.u32 %v2097, %v2098
      %v2100 = vand.u32 2147483647, %v1346
      %v2101 = vand.u32 2147483647, %v1446
      %v2102 = vmin.f32 %v2100, %v2101
      %v2103 = vmax.f32 %v2100, %v2101
      %v2104 = vrcp.pop %v2103
      %v2105 = vmul.f32 %v2102, %v2104
      %v2106 = vmul.f32 %v2105, %v2105
      %v2107 = vmul.f32 0.002785687, %v2106
      %v2108 = vadd.f32 %v2107, -0.015866
      %v2109 = vmul.f32 %v2108, %v2106
      %v2110 = vadd.f32 %v2109, 0.04247222
      %v2111 = vmul.f32 %v2110, %v2106
      %v2112 = vadd.f32 %v2111, -0.074975304
      %v2113 = vmul.f32 %v2112, %v2106
      %v2114 = vadd.f32 %v2113, 0.1064488
      %v2115 = vmul.f32 %v2114, %v2106
      %v2116 = vadd.f32 %v2115, -0.14207031
      %v2117 = vmul.f32 %v2116, %v2106
      %v2118 = vadd.f32 %v2117, 0.19993454
      %v2119 = vmul.f32 %v2118, %v2106
      %v2120 = vadd.f32 %v2119, -0.33333147
      %v2121 = vmul.f32 %v2120, %v2106
      %v2122 = vmul.f32 %v2121, %v2105
      %v2123 = vadd.f32 %v2122, %v2105
      %vm2124 = vcmp.gt.f32.partialorder %v2101, %v2100
      %v2125 = vsub.f32 1.5707964, %v2123
      %v2126 = vsel %vm2124, %v2125, %v2123
      %vm2127 = vcmp.lt.f32.partialorder %v1346, 0.0
      %v2128 = vsub.f32 3.1415927, %v2126
      %v2129 = vsel %vm2127, %v2128, %v2126
      %vm2130 = vcmp.lt.s32.totalorder %v1346, 0
      %v2131 = vsel %vm2130, 3.1415927, 0.0
      %vm2132 = vcmp.eq.f32.partialorder %v1446, 0.0
      %v2133 = vsel %vm2132, %v2131, %v2129
      %vm2134 = vcmp.ne.f32.partialorder %v1346, %v1346
      %vm2135 = vcmp.ne.f32.partialorder %v1446, %v1446
      %vm2136 = vmor %vm2134, %vm2135
      %v2137 = vsel %vm2136, nan, %v2133
      %vm2138 = vcmp.lt.f32.partialorder %v1346, 0.0
      %v2139 = vsel %vm2138, 2.3561945, 0.7853982
      %vm2140 = vcmp.eq.s32.totalorder %v2100, inf
      %vm2141 = vcmp.eq.s32.totalorder %v2101, inf
      %vm2142 = vmand %vm2140, %vm2141
      %v2143 = vsel %vm2142, %v2139, %v2137
      %v2144 = vand.u32 2147483647, %v2143
      %v2145 = vand.u32 %v1446, 2147483648
      %v2146 = vor.u32 %v2144, %v2145
      %v2147 = vand.u32 2147483647, %v1351
      %v2148 = vand.u32 2147483647, %v1451
      %v2149 = vmin.f32 %v2147, %v2148
      %v2150 = vmax.f32 %v2147, %v2148
      %v2151 = vrcp.pop %v2150
      %v2152 = vmul.f32 %v2149, %v2151
      %v2153 = vmul.f32 %v2152, %v2152
      %v2154 = vmul.f32 0.002785687, %v2153
      %v2155 = vadd.f32 %v2154, -0.015866
      %v2156 = vmul.f32 %v2155, %v2153
      %v2157 = vadd.f32 %v2156, 0.04247222
      %v2158 = vmul.f32 %v2157, %v2153
      %v2159 = vadd.f32 %v2158, -0.074975304
      %v2160 = vmul.f32 %v2159, %v2153
      %v2161 = vadd.f32 %v2160, 0.1064488
      %v2162 = vmul.f32 %v2161, %v2153
      %v2163 = vadd.f32 %v2162, -0.14207031
      %v2164 = vmul.f32 %v2163, %v2153
      %v2165 = vadd.f32 %v2164, 0.19993454
      %v2166 = vmul.f32 %v2165, %v2153
      %v2167 = vadd.f32 %v2166, -0.33333147
      %v2168 = vmul.f32 %v2167, %v2153
      %v2169 = vmul.f32 %v2168, %v2152
      %v2170 = vadd.f32 %v2169, %v2152
      %vm2171 = vcmp.gt.f32.partialorder %v2148, %v2147
      %v2172 = vsub.f32 1.5707964, %v2170
      %v2173 = vsel %vm2171, %v2172, %v2170
      %vm2174 = vcmp.lt.f32.partialorder %v1351, 0.0
      %v2175 = vsub.f32 3.1415927, %v2173
      %v2176 = vsel %vm2174, %v2175, %v2173
      %vm2177 = vcmp.lt.s32.totalorder %v1351, 0
      %v2178 = vsel %vm2177, 3.1415927, 0.0
      %vm2179 = vcmp.eq.f32.partialorder %v1451, 0.0
      %v2180 = vsel %vm2179, %v2178, %v2176
      %vm2181 = vcmp.ne.f32.partialorder %v1351, %v1351
      %vm2182 = vcmp.ne.f32.partialorder %v1451, %v1451
      %vm2183 = vmor %vm2181, %vm2182
      %v2184 = vsel %vm2183, nan, %v2180
      %vm2185 = vcmp.lt.f32.partialorder %v1351, 0.0
      %v2186 = vsel %vm2185, 2.3561945, 0.7853982
      %vm2187 = vcmp.eq.s32.totalorder %v2147, inf
      %vm2188 = vcmp.eq.s32.totalorder %v2148, inf
      %vm2189 = vmand %vm2187, %vm2188
      %v2190 = vsel %vm2189, %v2186, %v2184
      %v2191 = vand.u32 2147483647, %v2190
      %v2192 = vand.u32 %v1451, 2147483648
      %v2193 = vor.u32 %v2191, %v2192
      %v2194 = vand.u32 2147483647, %v1356
      %v2195 = vand.u32 2147483647, %v1456
      %v2196 = vmin.f32 %v2194, %v2195
      %v2197 = vmax.f32 %v2194, %v2195
      %v2198 = vrcp.pop %v2197
      %v2199 = vmul.f32 %v2196, %v2198
      %v2200 = vmul.f32 %v2199, %v2199
      %v2201 = vmul.f32 0.002785687, %v2200
      %v2202 = vadd.f32 %v2201, -0.015866
      %v2203 = vmul.f32 %v2202, %v2200
      %v2204 = vadd.f32 %v2203, 0.04247222
      %v2205 = vmul.f32 %v2204, %v2200
      %v2206 = vadd.f32 %v2205, -0.074975304
      %v2207 = vmul.f32 %v2206, %v2200
      %v2208 = vadd.f32 %v2207, 0.1064488
      %v2209 = vmul.f32 %v2208, %v2200
      %v2210 = vadd.f32 %v2209, -0.14207031
      %v2211 = vmul.f32 %v2210, %v2200
      %v2212 = vadd.f32 %v2211, 0.19993454
      %v2213 = vmul.f32 %v2212, %v2200
      %v2214 = vadd.f32 %v2213, -0.33333147
      %v2215 = vmul.f32 %v2214, %v2200
      %v2216 = vmul.f32 %v2215, %v2199
      %v2217 = vadd.f32 %v2216, %v2199
      %vm2218 = vcmp.gt.f32.partialorder %v2195, %v2194
      %v2219 = vsub.f32 1.5707964, %v2217
      %v2220 = vsel %vm2218, %v2219, %v2217
      %vm2221 = vcmp.lt.f32.partialorder %v1356, 0.0
      %v2222 = vsub.f32 3.1415927, %v2220
      %v2223 = vsel %vm2221, %v2222, %v2220
      %vm2224 = vcmp.lt.s32.totalorder %v1356, 0
      %v2225 = vsel %vm2224, 3.1415927, 0.0
      %vm2226 = vcmp.eq.f32.partialorder %v1456, 0.0
      %v2227 = vsel %vm2226, %v2225, %v2223
      %vm2228 = vcmp.ne.f32.partialorder %v1356, %v1356
      %vm2229 = vcmp.ne.f32.partialorder %v1456, %v1456
      %vm2230 = vmor %vm2228, %vm2229
      %v2231 = vsel %vm2230, nan, %v2227
      %vm2232 = vcmp.lt.f32.partialorder %v1356, 0.0
      %v2233 = vsel %vm2232, 2.3561945, 0.7853982
      %vm2234 = vcmp.eq.s32.totalorder %v2194, inf
      %vm2235 = vcmp.eq.s32.totalorder %v2195, inf
      %vm2236 = vmand %vm2234, %vm2235
      %v2237 = vsel %vm2236, %v2233, %v2231
      %v2238 = vand.u32 2147483647, %v2237
      %v2239 = vand.u32 %v1456, 2147483648
      %v2240 = vor.u32 %v2238, %v2239
      %v2241 = vand.u32 2147483647, %v1361
      %v2242 = vand.u32 2147483647, %v1461
      %v2243 = vmin.f32 %v2241, %v2242
      %v2244 = vmax.f32 %v2241, %v2242
      %v2245 = vrcp.pop %v2244
      %v2246 = vmul.f32 %v2243, %v2245
      %v2247 = vmul.f32 %v2246, %v2246
      %v2248 = vmul.f32 0.002785687, %v2247
      %v2249 = vadd.f32 %v2248, -0.015866
      %v2250 = vmul.f32 %v2249, %v2247
      %v2251 = vadd.f32 %v2250, 0.04247222
      %v2252 = vmul.f32 %v2251, %v2247
      %v2253 = vadd.f32 %v2252, -0.074975304
      %v2254 = vmul.f32 %v2253, %v2247
      %v2255 = vadd.f32 %v2254, 0.1064488
      %v2256 = vmul.f32 %v2255, %v2247
      %v2257 = vadd.f32 %v2256, -0.14207031
      %v2258 = vmul.f32 %v2257, %v2247
      %v2259 = vadd.f32 %v2258, 0.19993454
      %v2260 = vmul.f32 %v2259, %v2247
      %v2261 = vadd.f32 %v2260, -0.33333147
      %v2262 = vmul.f32 %v2261, %v2247
      %v2263 = vmul.f32 %v2262, %v2246
      %v2264 = vadd.f32 %v2263, %v2246
      %vm2265 = vcmp.gt.f32.partialorder %v2242, %v2241
      %v2266 = vsub.f32 1.5707964, %v2264
      %v2267 = vsel %vm2265, %v2266, %v2264
      %vm2268 = vcmp.lt.f32.partialorder %v1361, 0.0
      %v2269 = vsub.f32 3.1415927, %v2267
      %v2270 = vsel %vm2268, %v2269, %v2267
      %vm2271 = vcmp.lt.s32.totalorder %v1361, 0
      %v2272 = vsel %vm2271, 3.1415927, 0.0
      %vm2273 = vcmp.eq.f32.partialorder %v1461, 0.0
      %v2274 = vsel %vm2273, %v2272, %v2270
      %vm2275 = vcmp.ne.f32.partialorder %v1361, %v1361
      %vm2276 = vcmp.ne.f32.partialorder %v1461, %v1461
      %vm2277 = vmor %vm2275, %vm2276
      %v2278 = vsel %vm2277, nan, %v2274
      %vm2279 = vcmp.lt.f32.partialorder %v1361, 0.0
      %v2280 = vsel %vm2279, 2.3561945, 0.7853982
      %vm2281 = vcmp.eq.s32.totalorder %v2241, inf
      %vm2282 = vcmp.eq.s32.totalorder %v2242, inf
      %vm2283 = vmand %vm2281, %vm2282
      %v2284 = vsel %vm2283, %v2280, %v2278
      %v2285 = vand.u32 2147483647, %v2284
      %v2286 = vand.u32 %v1461, 2147483648
      %v2287 = vor.u32 %v2285, %v2286
      %v2288 = vand.u32 2147483647, %v1366
      %v2289 = vand.u32 2147483647, %v1466
      %v2290 = vmin.f32 %v2288, %v2289
      %v2291 = vmax.f32 %v2288, %v2289
      %v2292 = vrcp.pop %v2291
      %v2293 = vmul.f32 %v2290, %v2292
      %v2294 = vmul.f32 %v2293, %v2293
      %v2295 = vmul.f32 0.002785687, %v2294
      %v2296 = vadd.f32 %v2295, -0.015866
      %v2297 = vmul.f32 %v2296, %v2294
      %v2298 = vadd.f32 %v2297, 0.04247222
      %v2299 = vmul.f32 %v2298, %v2294
      %v2300 = vadd.f32 %v2299, -0.074975304
      %v2301 = vmul.f32 %v2300, %v2294
      %v2302 = vadd.f32 %v2301, 0.1064488
      %v2303 = vmul.f32 %v2302, %v2294
      %v2304 = vadd.f32 %v2303, -0.14207031
      %v2305 = vmul.f32 %v2304, %v2294
      %v2306 = vadd.f32 %v2305, 0.19993454
      %v2307 = vmul.f32 %v2306, %v2294
      %v2308 = vadd.f32 %v2307, -0.33333147
      %v2309 = vmul.f32 %v2308, %v2294
      %v2310 = vmul.f32 %v2309, %v2293
      %v2311 = vadd.f32 %v2310, %v2293
      %vm2312 = vcmp.gt.f32.partialorder %v2289, %v2288
      %v2313 = vsub.f32 1.5707964, %v2311
      %v2314 = vsel %vm2312, %v2313, %v2311
      %vm2315 = vcmp.lt.f32.partialorder %v1366, 0.0
      %v2316 = vsub.f32 3.1415927, %v2314
      %v2317 = vsel %vm2315, %v2316, %v2314
      %vm2318 = vcmp.lt.s32.totalorder %v1366, 0
      %v2319 = vsel %vm2318, 3.1415927, 0.0
      %vm2320 = vcmp.eq.f32.partialorder %v1466, 0.0
      %v2321 = vsel %vm2320, %v2319, %v2317
      %vm2322 = vcmp.ne.f32.partialorder %v1366, %v1366
      %vm2323 = vcmp.ne.f32.partialorder %v1466, %v1466
      %vm2324 = vmor %vm2322, %vm2323
      %v2325 = vsel %vm2324, nan, %v2321
      %vm2326 = vcmp.lt.f32.partialorder %v1366, 0.0
      %v2327 = vsel %vm2326, 2.3561945, 0.7853982
      %vm2328 = vcmp.eq.s32.totalorder %v2288, inf
      %vm2329 = vcmp.eq.s32.totalorder %v2289, inf
      %vm2330 = vmand %vm2328, %vm2329
      %v2331 = vsel %vm2330, %v2327, %v2325
      %v2332 = vand.u32 2147483647, %v2331
      %v2333 = vand.u32 %v1466, 2147483648
      %v2334 = vor.u32 %v2332, %v2333
      %v2335 = vand.u32 2147483647, %v1371
      %v2336 = vand.u32 2147483647, %v1471
      %v2337 = vmin.f32 %v2335, %v2336
      %v2338 = vmax.f32 %v2335, %v2336
      %v2339 = vrcp.pop %v2338
      %v2340 = vmul.f32 %v2337, %v2339
      %v2341 = vmul.f32 %v2340, %v2340
      %v2342 = vmul.f32 0.002785687, %v2341
      %v2343 = vadd.f32 %v2342, -0.015866
      %v2344 = vmul.f32 %v2343, %v2341
      %v2345 = vadd.f32 %v2344, 0.04247222
      %v2346 = vmul.f32 %v2345, %v2341
      %v2347 = vadd.f32 %v2346, -0.074975304
      %v2348 = vmul.f32 %v2347, %v2341
      %v2349 = vadd.f32 %v2348, 0.1064488
      %v2350 = vmul.f32 %v2349, %v2341
      %v2351 = vadd.f32 %v2350, -0.14207031
      %v2352 = vmul.f32 %v2351, %v2341
      %v2353 = vadd.f32 %v2352, 0.19993454
      %v2354 = vmul.f32 %v2353, %v2341
      %v2355 = vadd.f32 %v2354, -0.33333147
      %v2356 = vmul.f32 %v2355, %v2341
      %v2357 = vmul.f32 %v2356, %v2340
      %v2358 = vadd.f32 %v2357, %v2340
      %vm2359 = vcmp.gt.f32.partialorder %v2336, %v2335
      %v2360 = vsub.f32 1.5707964, %v2358
      %v2361 = vsel %vm2359, %v2360, %v2358
      %vm2362 = vcmp.lt.f32.partialorder %v1371, 0.0
      %v2363 = vsub.f32 3.1415927, %v2361
      %v2364 = vsel %vm2362, %v2363, %v2361
      %vm2365 = vcmp.lt.s32.totalorder %v1371, 0
      %v2366 = vsel %vm2365, 3.1415927, 0.0
      %vm2367 = vcmp.eq.f32.partialorder %v1471, 0.0
      %v2368 = vsel %vm2367, %v2366, %v2364
      %vm2369 = vcmp.ne.f32.partialorder %v1371, %v1371
      %vm2370 = vcmp.ne.f32.partialorder %v1471, %v1471
      %vm2371 = vmor %vm2369, %vm2370
      %v2372 = vsel %vm2371, nan, %v2368
      %vm2373 = vcmp.lt.f32.partialorder %v1371, 0.0
      %v2374 = vsel %vm2373, 2.3561945, 0.7853982
      %vm2375 = vcmp.eq.s32.totalorder %v2335, inf
      %vm2376 = vcmp.eq.s32.totalorder %v2336, inf
      %vm2377 = vmand %vm2375, %vm2376
      %v2378 = vsel %vm2377, %v2374, %v2372
      %v2379 = vand.u32 2147483647, %v2378
      %v2380 = vand.u32 %v1471, 2147483648
      %v2381 = vor.u32 %v2379, %v2380
      %v2382 = vand.u32 2147483647, %v1376
      %v2383 = vand.u32 2147483647, %v1476
      %v2384 = vmin.f32 %v2382, %v2383
      %v2385 = vmax.f32 %v2382, %v2383
      %v2386 = vrcp.pop %v2385
      %v2387 = vmul.f32 %v2384, %v2386
      %v2388 = vmul.f32 %v2387, %v2387
      %v2389 = vmul.f32 0.002785687, %v2388
      %v2390 = vadd.f32 %v2389, -0.015866
      %v2391 = vmul.f32 %v2390, %v2388
      %v2392 = vadd.f32 %v2391, 0.04247222
      %v2393 = vmul.f32 %v2392, %v2388
      %v2394 = vadd.f32 %v2393, -0.074975304
      %v2395 = vmul.f32 %v2394, %v2388
      %v2396 = vadd.f32 %v2395, 0.1064488
      %v2397 = vmul.f32 %v2396, %v2388
      %v2398 = vadd.f32 %v2397, -0.14207031
      %v2399 = vmul.f32 %v2398, %v2388
      %v2400 = vadd.f32 %v2399, 0.19993454
      %v2401 = vmul.f32 %v2400, %v2388
      %v2402 = vadd.f32 %v2401, -0.33333147
      %v2403 = vmul.f32 %v2402, %v2388
      %v2404 = vmul.f32 %v2403, %v2387
      %v2405 = vadd.f32 %v2404, %v2387
      %vm2406 = vcmp.gt.f32.partialorder %v2383, %v2382
      %v2407 = vsub.f32 1.5707964, %v2405
      %v2408 = vsel %vm2406, %v2407, %v2405
      %vm2409 = vcmp.lt.f32.partialorder %v1376, 0.0
      %v2410 = vsub.f32 3.1415927, %v2408
      %v2411 = vsel %vm2409, %v2410, %v2408
      %vm2412 = vcmp.lt.s32.totalorder %v1376, 0
      %v2413 = vsel %vm2412, 3.1415927, 0.0
      %vm2414 = vcmp.eq.f32.partialorder %v1476, 0.0
      %v2415 = vsel %vm2414, %v2413, %v2411
      %vm2416 = vcmp.ne.f32.partialorder %v1376, %v1376
      %vm2417 = vcmp.ne.f32.partialorder %v1476, %v1476
      %vm2418 = vmor %vm2416, %vm2417
      %v2419 = vsel %vm2418, nan, %v2415
      %vm2420 = vcmp.lt.f32.partialorder %v1376, 0.0
      %v2421 = vsel %vm2420, 2.3561945, 0.7853982
      %vm2422 = vcmp.eq.s32.totalorder %v2382, inf
      %vm2423 = vcmp.eq.s32.totalorder %v2383, inf
      %vm2424 = vmand %vm2422, %vm2423
      %v2425 = vsel %vm2424, %v2421, %v2419
      %v2426 = vand.u32 2147483647, %v2425
      %v2427 = vand.u32 %v1476, 2147483648
      %v2428 = vor.u32 %v2426, %v2427
      %v2429 = vand.u32 2147483647, %v1381
      %v2430 = vand.u32 2147483647, %v1481
      %v2431 = vmin.f32 %v2429, %v2430
      %v2432 = vmax.f32 %v2429, %v2430
      %v2433 = vrcp.pop %v2432
      %v2434 = vmul.f32 %v2431, %v2433
      %v2435 = vmul.f32 %v2434, %v2434
      %v2436 = vmul.f32 0.002785687, %v2435
      %v2437 = vadd.f32 %v2436, -0.015866
      %v2438 = vmul.f32 %v2437, %v2435
      %v2439 = vadd.f32 %v2438, 0.04247222
      %v2440 = vmul.f32 %v2439, %v2435
      %v2441 = vadd.f32 %v2440, -0.074975304
      %v2442 = vmul.f32 %v2441, %v2435
      %v2443 = vadd.f32 %v2442, 0.1064488
      %v2444 = vmul.f32 %v2443, %v2435
      %v2445 = vadd.f32 %v2444, -0.14207031
      %v2446 = vmul.f32 %v2445, %v2435
      %v2447 = vadd.f32 %v2446, 0.19993454
      %v2448 = vmul.f32 %v2447, %v2435
      %v2449 = vadd.f32 %v2448, -0.33333147
      %v2450 = vmul.f32 %v2449, %v2435
      %v2451 = vmul.f32 %v2450, %v2434
      %v2452 = vadd.f32 %v2451, %v2434
      %vm2453 = vcmp.gt.f32.partialorder %v2430, %v2429
      %v2454 = vsub.f32 1.5707964, %v2452
      %v2455 = vsel %vm2453, %v2454, %v2452
      %vm2456 = vcmp.lt.f32.partialorder %v1381, 0.0
      %v2457 = vsub.f32 3.1415927, %v2455
      %v2458 = vsel %vm2456, %v2457, %v2455
      %vm2459 = vcmp.lt.s32.totalorder %v1381, 0
      %v2460 = vsel %vm2459, 3.1415927, 0.0
      %vm2461 = vcmp.eq.f32.partialorder %v1481, 0.0
      %v2462 = vsel %vm2461, %v2460, %v2458
      %vm2463 = vcmp.ne.f32.partialorder %v1381, %v1381
      %vm2464 = vcmp.ne.f32.partialorder %v1481, %v1481
      %vm2465 = vmor %vm2463, %vm2464
      %v2466 = vsel %vm2465, nan, %v2462
      %vm2467 = vcmp.lt.f32.partialorder %v1381, 0.0
      %v2468 = vsel %vm2467, 2.3561945, 0.7853982
      %vm2469 = vcmp.eq.s32.totalorder %v2429, inf
      %vm2470 = vcmp.eq.s32.totalorder %v2430, inf
      %vm2471 = vmand %vm2469, %vm2470
      %v2472 = vsel %vm2471, %v2468, %v2466
      %v2473 = vand.u32 2147483647, %v2472
      %v2474 = vand.u32 %v1481, 2147483648
      %v2475 = vor.u32 %v2473, %v2474
      %v2476 = vand.u32 2147483647, %v1386
      %v2477 = vand.u32 2147483647, %v1486
      %v2478 = vmin.f32 %v2476, %v2477
      %v2479 = vmax.f32 %v2476, %v2477
      %v2480 = vrcp.pop %v2479
      %v2481 = vmul.f32 %v2478, %v2480
      %v2482 = vmul.f32 %v2481, %v2481
      %v2483 = vmul.f32 0.002785687, %v2482
      %v2484 = vadd.f32 %v2483, -0.015866
      %v2485 = vmul.f32 %v2484, %v2482
      %v2486 = vadd.f32 %v2485, 0.04247222
      %v2487 = vmul.f32 %v2486, %v2482
      %v2488 = vadd.f32 %v2487, -0.074975304
      %v2489 = vmul.f32 %v2488, %v2482
      %v2490 = vadd.f32 %v2489, 0.1064488
      %v2491 = vmul.f32 %v2490, %v2482
      %v2492 = vadd.f32 %v2491, -0.14207031
      %v2493 = vmul.f32 %v2492, %v2482
      %v2494 = vadd.f32 %v2493, 0.19993454
      %v2495 = vmul.f32 %v2494, %v2482
      %v2496 = vadd.f32 %v2495, -0.33333147
      %v2497 = vmul.f32 %v2496, %v2482
      %v2498 = vmul.f32 %v2497, %v2481
      %v2499 = vadd.f32 %v2498, %v2481
      %vm2500 = vcmp.gt.f32.partialorder %v2477, %v2476
      %v2501 = vsub.f32 1.5707964, %v2499
      %v2502 = vsel %vm2500, %v2501, %v2499
      %vm2503 = vcmp.lt.f32.partialorder %v1386, 0.0
      %v2504 = vsub.f32 3.1415927, %v2502
      %v2505 = vsel %vm2503, %v2504, %v2502
      %vm2506 = vcmp.lt.s32.totalorder %v1386, 0
      %v2507 = vsel %vm2506, 3.1415927, 0.0
      %vm2508 = vcmp.eq.f32.partialorder %v1486, 0.0
      %v2509 = vsel %vm2508, %v2507, %v2505
      %vm2510 = vcmp.ne.f32.partialorder %v1386, %v1386
      %vm2511 = vcmp.ne.f32.partialorder %v1486, %v1486
      %vm2512 = vmor %vm2510, %vm2511
      %v2513 = vsel %vm2512, nan, %v2509
      %vm2514 = vcmp.lt.f32.partialorder %v1386, 0.0
      %v2515 = vsel %vm2514, 2.3561945, 0.7853982
      %vm2516 = vcmp.eq.s32.totalorder %v2476, inf
      %vm2517 = vcmp.eq.s32.totalorder %v2477, inf
      %vm2518 = vmand %vm2516, %vm2517
      %v2519 = vsel %vm2518, %v2515, %v2513
      %v2520 = vand.u32 2147483647, %v2519
      %v2521 = vand.u32 %v1486, 2147483648
      %v2522 = vor.u32 %v2520, %v2521
      %v2523 = vand.u32 2147483647, %v1391
      %v2524 = vand.u32 2147483647, %v1491
      %v2525 = vmin.f32 %v2523, %v2524
      %v2526 = vmax.f32 %v2523, %v2524
      %v2527 = vrcp.pop %v2526
      %v2528 = vmul.f32 %v2525, %v2527
      %v2529 = vmul.f32 %v2528, %v2528
      %v2530 = vmul.f32 0.002785687, %v2529
      %v2531 = vadd.f32 %v2530, -0.015866
      %v2532 = vmul.f32 %v2531, %v2529
      %v2533 = vadd.f32 %v2532, 0.04247222
      %v2534 = vmul.f32 %v2533, %v2529
      %v2535 = vadd.f32 %v2534, -0.074975304
      %v2536 = vmul.f32 %v2535, %v2529
      %v2537 = vadd.f32 %v2536, 0.1064488
      %v2538 = vmul.f32 %v2537, %v2529
      %v2539 = vadd.f32 %v2538, -0.14207031
      %v2540 = vmul.f32 %v2539, %v2529
      %v2541 = vadd.f32 %v2540, 0.19993454
      %v2542 = vmul.f32 %v2541, %v2529
      %v2543 = vadd.f32 %v2542, -0.33333147
      %v2544 = vmul.f32 %v2543, %v2529
      %v2545 = vmul.f32 %v2544, %v2528
      %v2546 = vadd.f32 %v2545, %v2528
      %vm2547 = vcmp.gt.f32.partialorder %v2524, %v2523
      %v2548 = vsub.f32 1.5707964, %v2546
      %v2549 = vsel %vm2547, %v2548, %v2546
      %vm2550 = vcmp.lt.f32.partialorder %v1391, 0.0
      %v2551 = vsub.f32 3.1415927, %v2549
      %v2552 = vsel %vm2550, %v2551, %v2549
      %vm2553 = vcmp.lt.s32.totalorder %v1391, 0
      %v2554 = vsel %vm2553, 3.1415927, 0.0
      %vm2555 = vcmp.eq.f32.partialorder %v1491, 0.0
      %v2556 = vsel %vm2555, %v2554, %v2552
      %vm2557 = vcmp.ne.f32.partialorder %v1391, %v1391
      %vm2558 = vcmp.ne.f32.partialorder %v1491, %v1491
      %vm2559 = vmor %vm2557, %vm2558
      %v2560 = vsel %vm2559, nan, %v2556
      %vm2561 = vcmp.lt.f32.partialorder %v1391, 0.0
      %v2562 = vsel %vm2561, 2.3561945, 0.7853982
      %vm2563 = vcmp.eq.s32.totalorder %v2523, inf
      %vm2564 = vcmp.eq.s32.totalorder %v2524, inf
      %vm2565 = vmand %vm2563, %vm2564
      %v2566 = vsel %vm2565, %v2562, %v2560
      %v2567 = vand.u32 2147483647, %v2566
      %v2568 = vand.u32 %v1491, 2147483648
      %v2569 = vor.u32 %v2567, %v2568
      %v2570 = vand.u32 2147483647, %v1396
      %v2571 = vand.u32 2147483647, %v1496
      %v2572 = vmin.f32 %v2570, %v2571
      %v2573 = vmax.f32 %v2570, %v2571
      %v2574 = vrcp.pop %v2573
      %v2575 = vmul.f32 %v2572, %v2574
      %v2576 = vmul.f32 %v2575, %v2575
      %v2577 = vmul.f32 0.002785687, %v2576
      %v2578 = vadd.f32 %v2577, -0.015866
      %v2579 = vmul.f32 %v2578, %v2576
      %v2580 = vadd.f32 %v2579, 0.04247222
      %v2581 = vmul.f32 %v2580, %v2576
      %v2582 = vadd.f32 %v2581, -0.074975304
      %v2583 = vmul.f32 %v2582, %v2576
      %v2584 = vadd.f32 %v2583, 0.1064488
      %v2585 = vmul.f32 %v2584, %v2576
      %v2586 = vadd.f32 %v2585, -0.14207031
      %v2587 = vmul.f32 %v2586, %v2576
      %v2588 = vadd.f32 %v2587, 0.19993454
      %v2589 = vmul.f32 %v2588, %v2576
      %v2590 = vadd.f32 %v2589, -0.33333147
      %v2591 = vmul.f32 %v2590, %v2576
      %v2592 = vmul.f32 %v2591, %v2575
      %v2593 = vadd.f32 %v2592, %v2575
      %vm2594 = vcmp.gt.f32.partialorder %v2571, %v2570
      %v2595 = vsub.f32 1.5707964, %v2593
      %v2596 = vsel %vm2594, %v2595, %v2593
      %vm2597 = vcmp.lt.f32.partialorder %v1396, 0.0
      %v2598 = vsub.f32 3.1415927, %v2596
      %v2599 = vsel %vm2597, %v2598, %v2596
      %vm2600 = vcmp.lt.s32.totalorder %v1396, 0
      %v2601 = vsel %vm2600, 3.1415927, 0.0
      %vm2602 = vcmp.eq.f32.partialorder %v1496, 0.0
      %v2603 = vsel %vm2602, %v2601, %v2599
      %vm2604 = vcmp.ne.f32.partialorder %v1396, %v1396
      %vm2605 = vcmp.ne.f32.partialorder %v1496, %v1496
      %vm2606 = vmor %vm2604, %vm2605
      %v2607 = vsel %vm2606, nan, %v2603
      %vm2608 = vcmp.lt.f32.partialorder %v1396, 0.0
      %v2609 = vsel %vm2608, 2.3561945, 0.7853982
      %vm2610 = vcmp.eq.s32.totalorder %v2570, inf
      %vm2611 = vcmp.eq.s32.totalorder %v2571, inf
      %vm2612 = vmand %vm2610, %vm2611
      %v2613 = vsel %vm2612, %v2609, %v2607
      %v2614 = vand.u32 2147483647, %v2613
      %v2615 = vand.u32 %v1496, 2147483648
      %v2616 = vor.u32 %v2614, %v2615
      %v2617 = vand.u32 2147483647, %v1401
      %v2618 = vand.u32 2147483647, %v1501
      %v2619 = vmin.f32 %v2617, %v2618
      %v2620 = vmax.f32 %v2617, %v2618
      %v2621 = vrcp.pop %v2620
      %v2622 = vmul.f32 %v2619, %v2621
      %v2623 = vmul.f32 %v2622, %v2622
      %v2624 = vmul.f32 0.002785687, %v2623
      %v2625 = vadd.f32 %v2624, -0.015866
      %v2626 = vmul.f32 %v2625, %v2623
      %v2627 = vadd.f32 %v2626, 0.04247222
      %v2628 = vmul.f32 %v2627, %v2623
      %v2629 = vadd.f32 %v2628, -0.074975304
      %v2630 = vmul.f32 %v2629, %v2623
      %v2631 = vadd.f32 %v2630, 0.1064488
      %v2632 = vmul.f32 %v2631, %v2623
      %v2633 = vadd.f32 %v2632, -0.14207031
      %v2634 = vmul.f32 %v2633, %v2623
      %v2635 = vadd.f32 %v2634, 0.19993454
      %v2636 = vmul.f32 %v2635, %v2623
      %v2637 = vadd.f32 %v2636, -0.33333147
      %v2638 = vmul.f32 %v2637, %v2623
      %v2639 = vmul.f32 %v2638, %v2622
      %v2640 = vadd.f32 %v2639, %v2622
      %vm2641 = vcmp.gt.f32.partialorder %v2618, %v2617
      %v2642 = vsub.f32 1.5707964, %v2640
      %v2643 = vsel %vm2641, %v2642, %v2640
      %vm2644 = vcmp.lt.f32.partialorder %v1401, 0.0
      %v2645 = vsub.f32 3.1415927, %v2643
      %v2646 = vsel %vm2644, %v2645, %v2643
      %vm2647 = vcmp.lt.s32.totalorder %v1401, 0
      %v2648 = vsel %vm2647, 3.1415927, 0.0
      %vm2649 = vcmp.eq.f32.partialorder %v1501, 0.0
      %v2650 = vsel %vm2649, %v2648, %v2646
      %vm2651 = vcmp.ne.f32.partialorder %v1401, %v1401
      %vm2652 = vcmp.ne.f32.partialorder %v1501, %v1501
      %vm2653 = vmor %vm2651, %vm2652
      %v2654 = vsel %vm2653, nan, %v2650
      %vm2655 = vcmp.lt.f32.partialorder %v1401, 0.0
      %v2656 = vsel %vm2655, 2.3561945, 0.7853982
      %vm2657 = vcmp.eq.s32.totalorder %v2617, inf
      %vm2658 = vcmp.eq.s32.totalorder %v2618, inf
      %vm2659 = vmand %vm2657, %vm2658
      %v2660 = vsel %vm2659, %v2656, %v2654
      %v2661 = vand.u32 2147483647, %v2660
      %v2662 = vand.u32 %v1501, 2147483648
      %v2663 = vor.u32 %v2661, %v2662
      %2664 = vst [vmem:[%s357] sm:$0xff] %v1770
      %2665 = vst [vmem:[%s357 + $0x8] sm:$0xff] %v1817
      %2666 = vst [vmem:[%s357 + $0x10] sm:$0xff] %v1864
      %2667 = vst [vmem:[%s357 + $0x18] sm:$0xff] %v1911
      %2668 = vst [vmem:[%s357 + $0x20] sm:$0xff] %v1958
      %2669 = vst [vmem:[%s357 + $0x28] sm:$0xff] %v2005
      %2670 = vst [vmem:[%s357 + $0x30] sm:$0xff] %v2052
      %2671 = vst [vmem:[%s357 + $0x38] sm:$0xff] %v2099
      %2672 = vst [vmem:[%s357 + $0x40] sm:$0xff] %v2146
      %2673 = vst [vmem:[%s357 + $0x48] sm:$0xff] %v2193
      %2674 = vst [vmem:[%s357 + $0x50] sm:$0xff] %v2240
      %2675 = vst [vmem:[%s357 + $0x58] sm:$0xff] %v2287
      %2676 = vst [vmem:[%s357 + $0x60] sm:$0xff] %v2334
      %2677 = vst [vmem:[%s357 + $0x68] sm:$0xff] %v2381
      %2678 = vst [vmem:[%s357 + $0x70] sm:$0xff] %v2428
      %2679 = vst [vmem:[%s357 + $0x78] sm:$0xff] %v2475
      %2680 = vst [vmem:[%s357 + $0x80] sm:$0xff] %v2522
      %2681 = vst [vmem:[%s357 + $0x88] sm:$0xff] %v2569
      %2682 = vst [vmem:[%s357 + $0x90] sm:$0xff] %v2616
      %2683 = vst [vmem:[%s357 + $0x98] sm:$0x1] %v2663
      %p2684 = scmp.lt.s32.totalorder %s21, 1
      %s2685 = scalar_select %p2684, %s21, 1
      %p2686 = scmp.lt.s32.totalorder %s22, 0
      %s2687 = scalar_select %p2686, %s22, 0
      %s2688 = smul.addr %s2685, 20
      %s2689 = sadd.s32 %s2687, %s2688
      %s2690 = smul.addr %s2689, 8
      %s2691 = scalar_lea.vmem %s4, %s2690
      %p2692 = scmp.lt.s32.totalorder %s21, 1
      %s2693 = scalar_select %p2692, %s21, 1
      %p2694 = scmp.lt.s32.totalorder %s22, 0
      %s2695 = scalar_select %p2694, %s22, 0
      %s2696 = smul.addr %s2693, 20
      %s2697 = sadd.s32 %s2695, %s2696
      %s2698 = smul.addr %s2697, 8
      %s2699 = scalar_lea.vmem %s5, %s2698
      // Predicated region
      $region37: #{spectrogram_forward.1} parent=35 // pred_check
        %p2700 = pneg %p151
      $region38: #{spectrogram_forward.1} parent=35 // pred_check_branch
        %2702 = sbr.rel (%p2700) target = $region40
      $region39: #{spectrogram_forward.1} parent=35 // pred_region
        _
      $region40: #{spectrogram_forward.1} parent=35 // pred_fallthru
        _
      // Predicated region
      $region41: #{spectrogram_forward.1} parent=35 // pred_check
        %p2703 = pneg %p179
      $region42: #{spectrogram_forward.1} parent=35 // pred_check_branch
        %2705 = sbr.rel (%p2703) target = $region44
      $region43: #{spectrogram_forward.1} parent=35 // pred_region
        _
      $region44: #{spectrogram_forward.1} parent=35 // pred_fallthru
        _
    $region36: #{spectrogram_forward.1} parent=5 // pred_fallthru
      _
    %p2706 = scmp.le.s32.totalorder 2, %s12
    // Predicated region
    $region45: #{spectrogram_forward.1} parent=5 // pred_check
      %p2707 = pneg %p2706
    $region46: #{spectrogram_forward.1} parent=5 // pred_check_branch
      %2709 = sbr.rel (%p2707) target = $region48
    $region47: #{spectrogram_forward.1} parent=5 // pred_region
      %s2710 = ssub.s32 %s12, 2
      // Predicated region
      $region49: #{spectrogram_forward.1} parent=47 // pred_check
        %p2711 = pneg %p157
      $region50: #{spectrogram_forward.1} parent=47 // pred_check_branch
        %2713 = sbr.rel (%p2711) target = $region52
      $region51: #{spectrogram_forward.1} parent=47 // pred_region
        %p2714 = scmp.lt.s32.totalorder %s23, 1
        %s2715 = scalar_select %p2714, %s23, 1
        %p2716 = scmp.lt.s32.totalorder %s24, 0
        %s2717 = scalar_select %p2716, %s24, 0
        %s2718 = smul.addr %s2715, 20
        %s2719 = sadd.s32 %s2717, %s2718
        %s2720 = smul.addr %s2719, 8
        %s2721 = scalar_lea.vmem %s4, %s2720
      $region52: #{spectrogram_forward.1} parent=47 // pred_fallthru
        _
      // Predicated region
      $region53: #{spectrogram_forward.1} parent=47 // pred_check
        %p2722 = pneg %p185
      $region54: #{spectrogram_forward.1} parent=47 // pred_check_branch
        %2724 = sbr.rel (%p2722) target = $region56
      $region55: #{spectrogram_forward.1} parent=47 // pred_region
        %p2725 = scmp.lt.s32.totalorder %s23, 1
        %s2726 = scalar_select %p2725, %s23, 1
        %p2727 = scmp.lt.s32.totalorder %s24, 0
        %s2728 = scalar_select %p2727, %s24, 0
        %s2729 = smul.addr %s2726, 20
        %s2730 = sadd.s32 %s2728, %s2729
        %s2731 = smul.addr %s2730, 8
        %s2732 = scalar_lea.vmem %s5, %s2731
      $region56: #{spectrogram_forward.1} parent=47 // pred_fallthru
        _
    $region48: #{spectrogram_forward.1} parent=5 // pred_fallthru
      _
  $region6: #{spectrogram_forward.1} parent=0 // loop_footer
    %s16 = sadd.s32 1, %s12
  $region7: #{spectrogram_forward.1} parent=0 // loop_footer_branch
    %11 = sbr.rel target = $region3
  $region8: #{spectrogram_forward.1} parent=0 // loop_exit
    _

</llo_original>
